<compile_context>
chip_gen: v5e
topology: v5e:2x2
jax: 0.10.0
libtpu: 0.0.40
codegen_flags: <defaults>
</compile_context>

<pallas_src>
import functools
import math

import jax
import jax.numpy as jnp
from jax import lax
from jax.experimental import pallas as pl
from jax.experimental.pallas import tpu as pltpu


# --------------------------------------------------------------------------- #
# Kernels                                                                      #
# --------------------------------------------------------------------------- #
def _attention_core(q, k, v, wo_ref, bo_ref, out_ref, ctx_ref, *,
                    num_heads, head_dim, compute_dtype, exp_dtype):
    """Shared per-head attention + fused output projection.

    q, k, v : (m, E) f32 projected activations (q already scaled by 1/sqrt(Dh)).
    ctx_ref : (m, E) f32 VMEM scratch slab; head h's context lands at lanes
              [h*Dh, (h+1)*Dh) so a single full-depth Wo matmul finishes the layer.
    """
    bt, seq, emb = out_ref.shape
    m = bt * seq
    f32 = jnp.float32
    approx = compute_dtype != f32     # EUP approx reciprocal only in bf16 mode

    for h in range(num_heads):        # static unroll; fine for small H
        lo = h * head_dim
        # Static lane slices; tile-aligned whenever Dh is a multiple of 128.
        q_h = q[:, lo:lo + head_dim].reshape(bt, seq, head_dim).astype(compute_dtype)
        k_h = k[:, lo:lo + head_dim].reshape(bt, seq, head_dim).astype(compute_dtype)
        v_h = v[:, lo:lo + head_dim].reshape(bt, seq, head_dim).astype(compute_dtype)

        # scores[b, i, j] = sum_d q_h[b, i, d] * k_h[b, j, d]   (no explicit K^T)
        s = lax.dot_general(q_h, k_h, (((2,), (2,)), ((0,), (0,))),
                            preferred_element_type=f32)           # (bt, S, S)

        # Numerically stable softmax; statistics in f32, exp optionally bf16.
        s_max = jnp.max(s, axis=-1, keepdims=True)
        ex = jnp.exp((s - s_max).astype(exp_dtype)).astype(f32)
        denom = jnp.sum(ex, axis=-1, keepdims=True)
        p = ex * pl.reciprocal(denom, approx=approx)
        # TODO(synk): training-mode dropout(0.1) on `p` would go here.

        # ctx[b, i, d] = sum_j p[b, i, j] * v_h[b, j, d]
        ctx = lax.dot_general(p.astype(compute_dtype), v_h,
                              (((2,), (1,)), ((0,), (0,))),
                              preferred_element_type=f32)          # (bt, S, Dh)
        ctx_ref[:, lo:lo + head_dim] = ctx.reshape(m, head_dim)

    # Head merge + output projection as ONE full-depth (K = E) MXU matmul.
    out = jnp.dot(ctx_ref[...].astype(compute_dtype), wo_ref[...],
                  preferred_element_type=f32) + bo_ref[...]
    out_ref[...] = out.reshape(bt, seq, emb).astype(out_ref.dtype)


def _mha_self_kernel(x_ref, wqkv_ref, wo_ref, bqkv_ref, bo_ref, out_ref, ctx_ref,
                     *, num_heads, head_dim, compute_dtype, exp_dtype):
    """Self-attention fast path: one fused (m, E) @ (E, 3E) QKV projection."""
    bt, seq, emb = x_ref.shape
    m = bt * seq
    f32 = jnp.float32

    x = x_ref[...].reshape(m, emb).astype(compute_dtype)
    qkv = jnp.dot(x, wqkv_ref[...], preferred_element_type=f32) + bqkv_ref[...]

    scale = 1.0 / math.sqrt(head_dim)
    q = qkv[:, :emb] * scale          # fold 1/sqrt(Dh) into Q
    k = qkv[:, emb:2 * emb]
    v = qkv[:, 2 * emb:]
    _attention_core(q, k, v, wo_ref, bo_ref, out_ref, ctx_ref,
                    num_heads=num_heads, head_dim=head_dim,
                    compute_dtype=compute_dtype, exp_dtype=exp_dtype)


def _mha_cross_kernel(q_ref, k_ref, v_ref, wqkv_ref, wo_ref, bqkv_ref, bo_ref,
                      out_ref, ctx_ref,
                      *, num_heads, head_dim, compute_dtype, exp_dtype):
    """General (cross-attention) path: Wq/Wk/Wv stacked as one (3, E, E) block."""
    bt, seq, emb = q_ref.shape
    m = bt * seq
    f32 = jnp.float32

    def proj(x_ref, idx):
        x = x_ref[...].reshape(m, emb).astype(compute_dtype)
        return jnp.dot(x, wqkv_ref[idx], preferred_element_type=f32) + bqkv_ref[idx]

    scale = 1.0 / math.sqrt(head_dim)
    q = proj(q_ref, 0) * scale
    k = proj(k_ref, 1)
    v = proj(v_ref, 2)
    _attention_core(q, k, v, wo_ref, bo_ref, out_ref, ctx_ref,
                    num_heads=num_heads, head_dim=head_dim,
                    compute_dtype=compute_dtype, exp_dtype=exp_dtype)


# --------------------------------------------------------------------------- #
# VMEM-aware tiling helpers                                                    #
# --------------------------------------------------------------------------- #
def _vmem_capacity_bytes():
    try:
        info = pltpu.get_tpu_info()
        cap = int(getattr(info, "vmem_capacity_bytes", 0))
        if cap > 0:
            return cap
    except Exception:
        pass
    return 64 * 1024 * 1024           # conservative: v7x per-TensorCore VMEM


def _is_v5_device():
    try:
        kind = jax.devices()[0].device_kind.lower()
    except Exception:
        return False
    return "v5" in kind


def _vmem_bytes_estimate(bt, seq, emb, num_heads, *, n_act_inputs, act_itemsize,
                         out_itemsize, w_itemsize, weight_buffers):
    """Rough per-grid-step VMEM footprint (with slack) for the tile picker."""
    m = bt * seq
    head_dim = emb // num_heads
    # Double-buffered activation in/out blocks managed by the pipeline.
    io = 2 * (n_act_inputs * act_itemsize + out_itemsize) * bt * seq * emb
    # Weight / bias blocks (single- or double-buffered), 4x (E, E) total.
    weights = weight_buffers * (4 * emb * emb * w_itemsize + 4 * emb * 4)
    # In-kernel f32 slabs: q/k/v (or fused qkv) + ctx scratch.
    slabs = 4 * m * emb * 4
    # Per-head temporaries: scores / exp / probs (f32) + compute-dtype head copies.
    per_head = 3 * bt * seq * seq * 4 + 4 * bt * seq * head_dim * 4
    return int(1.2 * (io + weights + slabs + per_head))


def _pick_batch_tile(batch, seq, emb, num_heads, *, vmem_budget, n_act_inputs,
                     act_itemsize, out_itemsize, w_itemsize, weight_buffers,
                     max_rows=512, min_rows_for_split=256):
    """Largest batch fold that fits VMEM and presents many rows to the MXU,
    while keeping >=2 grid steps (v7x second TensorCore) when that does not
    starve the MXU (>= min_rows_for_split rows per step)."""
    divisors = [d for d in range(1, batch + 1) if batch % d == 0]
    fits = [d for d in divisors
            if _vmem_bytes_estimate(d, seq, emb, num_heads,
                                    n_act_inputs=n_act_inputs,
                                    act_itemsize=act_itemsize,
                                    out_itemsize=out_itemsize,
                                    w_itemsize=w_itemsize,
                                    weight_buffers=weight_buffers) <= vmem_budget]
    fits = fits or [1]
    capped = [d for d in fits if d * seq <= max_rows] or [min(fits)]
    bt = max(capped)
    if bt == batch and batch > 1:
        smaller = [d for d in capped if d < batch]
        if smaller and max(smaller) * seq >= min_rows_for_split:
            bt = max(smaller)
    return bt


# --------------------------------------------------------------------------- #
# Wrapper                                                                      #
# --------------------------------------------------------------------------- #
def multi_head_attention(query, key, value, params, *, num_heads,
                         compute_dtype=jnp.bfloat16, batch_tile=None,
                         cast_inputs=True):
    """query/key/value: (B, S, E).

    params: (E, E) weights stored as (in, out) == W.T and (E,) biases.
    compute_dtype: MXU operand dtype.  bfloat16 (default) is recommended on every
      TPU generation; float32 gives strict parity with the PyTorch module.
      Softmax statistics, bias adds and matmul accumulation are f32 either way.
    """
    b, s, e = query.shape
    assert key.shape == (b, s, e) and value.shape == (b, s, e)
    assert e % num_heads == 0
    head_dim = e // num_heads
    out_dtype = query.dtype
    f32 = jnp.float32

    self_attn = (query is key) and (key is value)

    # bf16 exp only where the EUP is bf16-native (v6e/v7x); keep f32 on v5e.
    exp_dtype = compute_dtype
    if compute_dtype == f32 or _is_v5_device():
        exp_dtype = f32

    # Optionally pre-cast activations at the call boundary (halves input HBM
    # traffic in bf16 mode); output stays in the caller's dtype.
    act_dtype = out_dtype
    if cast_inputs and jnp.dtype(compute_dtype).itemsize < jnp.dtype(out_dtype).itemsize:
        act_dtype = jnp.dtype(compute_dtype)

    # Weights pre-cast once in the wrapper; biases stay f32.
    wq, wk, wv = params["wq"], params["wk"], params["wv"]
    bq, bk, bv = params["bq"], params["bk"], params["bv"]
    wo = params["wo"].astype(compute_dtype)
    bo = params["bo"].reshape(1, e).astype(f32)
    if self_attn:
        wqkv = jnp.concatenate([wq, wk, wv], axis=1).astype(compute_dtype)   # (E, 3E)
        bqkv = jnp.concatenate([bq, bk, bv]).reshape(1, 3 * e).astype(f32)
        acts = (query.astype(act_dtype),)
        n_act_inputs = 1
        w_shapes = [(e, 3 * e), (e, e), (1, 3 * e), (1, e)]
        kernel_fn = _mha_self_kernel
    else:
        wqkv = jnp.stack([wq, wk, wv], axis=0).astype(compute_dtype)         # (3, E, E)
        bqkv = jnp.stack([bq, bk, bv], axis=0).reshape(3, 1, e).astype(f32)
        acts = (query.astype(act_dtype), key.astype(act_dtype),
                value.astype(act_dtype))
        n_act_inputs = 3
        w_shapes = [(3, e, e), (e, e), (3, 1, e), (1, e)]
        kernel_fn = _mha_cross_kernel

    # Explicit per-generation VMEM limit (~3/4 of physical per-core VMEM).
    cap = _vmem_capacity_bytes()
    vmem_limit = max(32 * 1024 * 1024, min(int(cap * 3 // 4), 128 * 1024 * 1024))

    act_item = jnp.dtype(act_dtype).itemsize
    w_item = jnp.dtype(compute_dtype).itemsize
    out_item = jnp.dtype(out_dtype).itemsize
    if batch_tile is None:
        batch_tile = _pick_batch_tile(
            b, s, e, num_heads, vmem_budget=vmem_limit,
            n_act_inputs=n_act_inputs, act_itemsize=act_item,
            out_itemsize=out_item, w_itemsize=w_item, weight_buffers=1)
    assert b % batch_tile == 0, (b, batch_tile)
    grid = (b // batch_tile,)

    act_spec = pl.BlockSpec((batch_tile, s, e), lambda i: (i, 0, 0))

    kernel = functools.partial(kernel_fn, num_heads=num_heads, head_dim=head_dim,
                               compute_dtype=compute_dtype, exp_dtype=exp_dtype)

    # Advisory cost estimate for XLA's scheduler.
    flops = 8 * b * s * e * e + 4 * b * s * s * e
    transcendentals = b * num_heads * s * s
    bytes_accessed = ((n_act_inputs * act_item + out_item) * b * s * e
                      + 4 * e * e * w_item + 4 * e * 4)
    cost = pl.CostEstimate(flops=flops, transcendentals=transcendentals,
                           bytes_accessed=bytes_accessed)

    def const_spec(shape, single_buffer):
        nd = len(shape)

        def index_map(i):
            return (0,) * nd

        if single_buffer:
            # Constant index_map -> double buffering is pure VMEM waste.
            return pl.BlockSpec(shape, index_map, pipeline_mode=pl.Buffered(1))
        return pl.BlockSpec(shape, index_map)

    def call(single_buffer_weights):
        in_specs = ([act_spec] * n_act_inputs
                    + [const_spec(sh, single_buffer_weights) for sh in w_shapes])
        return pl.pallas_call(
            kernel,
            out_shape=jax.ShapeDtypeStruct((b, s, e), out_dtype),
            grid_spec=pltpu.PrefetchScalarGridSpec(
                num_scalar_prefetch=0,
                grid=grid,
                in_specs=in_specs,
                out_specs=act_spec,
                scratch_shapes=[pltpu.VMEM((batch_tile * s, e), f32)]),
            compiler_params=pltpu.CompilerParams(
                dimension_semantics=("parallel",),
                vmem_limit_bytes=vmem_limit),
            cost_estimate=cost,
        )(*acts, wqkv, wo, bqkv, bo)

    try:
        return call(single_buffer_weights=True)
    except Exception:
        # Older JAX without BlockSpec(pipeline_mode=...): default buffering.
        return call(single_buffer_weights=False)


# --------------------------------------------------------------------------- #
# Reference & init                                                             #
# --------------------------------------------------------------------------- #
def _reference(query, key, value, params, *, num_heads):
    """Plain-JAX reference mirroring the PyTorch forward (mask=None, eval dropout)."""
    B, S, E = query.shape
    Dh = E // num_heads

    def lin(x, w, b):
        return x @ w + b

    q = lin(query, params["wq"], params["bq"]).reshape(B, S, num_heads, Dh).transpose(0, 2, 1, 3)
    k = lin(key, params["wk"], params["bk"]).reshape(B, S, num_heads, Dh).transpose(0, 2, 1, 3)
    v = lin(value, params["wv"], params["bv"]).reshape(B, S, num_heads, Dh).transpose(0, 2, 1, 3)

    scores = jnp.einsum("bhqd,bhkd->bhqk", q, k) / math.sqrt(Dh)
    probs = jax.nn.softmax(scores, axis=-1)
    ctx = jnp.einsum("bhqk,bhkd->bhqd", probs, v)
    ctx = ctx.transpose(0, 2, 1, 3).reshape(B, S, E)
    return lin(ctx, params["wo"], params["bo"])


def _init_params(key, n_embd):
    """Deterministic nn.Linear-style init; weights stored as (in, out) = W.T."""
    ks = jax.random.split(key, 8)
    bound = 1.0 / math.sqrt(n_embd)

    def w(k):
        return jax.random.uniform(k, (n_embd, n_embd), jnp.float32, -bound, bound)

    def b(k):
        return jax.random.uniform(k, (n_embd,), jnp.float32, -bound, bound)

    return {
        "wq": w(ks[0]), "bq": b(ks[1]),
        "wk": w(ks[2]), "bk": b(ks[3]),
        "wv": w(ks[4]), "bv": b(ks[5]),
        "wo": w(ks[6]), "bo": b(ks[7]),
    }


if __name__ == "__main__":
    B, S, E, H = 2, 8, 32, 4   # n_embd=32, num_heads=4 -> attention_head_size=8

    root = jax.random.PRNGKey(0)
    k_q, k_k, k_v, k_x, k_p = jax.random.split(root, 5)

    query = jax.random.normal(k_q, (B, S, E), jnp.float32)
    key_in = jax.random.normal(k_k, (B, S, E), jnp.float32)
    value = jax.random.normal(k_v, (B, S, E), jnp.float32)
    x = jax.random.normal(k_x, (B, S, E), jnp.float32)
    params = _init_params(k_p, E)

    # 1) Cross-attention, f32 MXU operands: strict parity with the PyTorch module.
    ref_cross = _reference(query, key_in, value, params, num_heads=H)
    out_cross = multi_head_attention(query, key_in, value, params, num_heads=H,
                                     compute_dtype=jnp.float32)
    out_cross = jax.block_until_ready(out_cross)
    if not jnp.allclose(out_cross, ref_cross, atol=1e-5, rtol=1e-5):
        raise AssertionError("Pallas MHA (cross, f32) does not match reference")

    # 2) Self-attention (fused QKV path), f32 MXU operands: strict parity.
    ref_self = _reference(x, x, x, params, num_heads=H)
    out_self = multi_head_attention(x, x, x, params, num_heads=H,
                                    compute_dtype=jnp.float32)
    out_self = jax.block_until_ready(out_self)
    if not jnp.allclose(out_self, ref_self, atol=1e-5, rtol=1e-5):
        raise AssertionError("Pallas MHA (self, f32) does not match reference")

    # 3) Self-attention, default bf16 MXU operands (f32 accumulation): loose tol.
    out_bf16 = multi_head_attention(x, x, x, params, num_heads=H)
    out_bf16 = jax.block_until_ready(out_bf16)
    if not jnp.allclose(out_bf16, ref_self, atol=5e-2, rtol=5e-2):
        raise AssertionError("Pallas MHA (self, bf16) does not match reference")

    print("KERNEL_OK")
</pallas_src>

<mosaic_0001>
module attributes {stable_mosaic.version = 11 : i64} {
  func.func @_mha_cross_kernel(%arg0: i32, %arg1: memref<2x8x32xf32, #tpu.memory_space<vmem>>, %arg2: memref<2x8x32xf32, #tpu.memory_space<vmem>>, %arg3: memref<2x8x32xf32, #tpu.memory_space<vmem>>, %arg4: memref<3x32x32xf32, #tpu.memory_space<vmem>>, %arg5: memref<32x32xf32, #tpu.memory_space<vmem>>, %arg6: memref<3x1x32xf32, #tpu.memory_space<vmem>>, %arg7: memref<1x32xf32, #tpu.memory_space<vmem>>, %arg8: memref<2x8x32xf32, #tpu.memory_space<vmem>>, %arg9: memref<16x32xf32, #tpu.memory_space<vmem>>) attributes {dimension_semantics = [#tpu.dimension_semantics<parallel>], iteration_bounds = array<i64: 1>, scalar_prefetch = 0 : i64, scratch_operands = 1 : i64, tpu.core_type = #tpu.core_type<tc>, window_params = [{transform_indices = @transform_0, window_bounds = array<i64: 2, 8, 32>}, {transform_indices = @transform_1, window_bounds = array<i64: 2, 8, 32>}, {transform_indices = @transform_2, window_bounds = array<i64: 2, 8, 32>}, {pipeline_mode = #tpu.pipeline_mode<synchronous>, transform_indices = @transform_3, window_bounds = array<i64: 3, 32, 32>}, {pipeline_mode = #tpu.pipeline_mode<synchronous>, transform_indices = @transform_4, window_bounds = array<i64: 32, 32>}, {pipeline_mode = #tpu.pipeline_mode<synchronous>, transform_indices = @transform_5, window_bounds = array<i64: 3, 1, 32>}, {pipeline_mode = #tpu.pipeline_mode<synchronous>, transform_indices = @transform_6, window_bounds = array<i64: 1, 32>}, {transform_indices = @transform_7, window_bounds = array<i64: 2, 8, 32>}]} {
    %c0 = arith.constant 0 : index
    %c0_0 = arith.constant 0 : index
    %c0_1 = arith.constant 0 : index
    %0 = vector.load %arg1[%c0, %c0_0, %c0_1] : memref<2x8x32xf32, #tpu.memory_space<vmem>>, vector<2x8x32xf32>
    %1 = vector.shape_cast %0 : vector<2x8x32xf32> to vector<16x32xf32>
    %c0_2 = arith.constant 0 : index
    %c0_3 = arith.constant 0 : index
    %c0_4 = arith.constant 0 : index
    %2 = vector.load %arg4[%c0_2, %c0_3, %c0_4] : memref<3x32x32xf32, #tpu.memory_space<vmem>>, vector<1x32x32xf32>
    %3 = vector.shape_cast %2 : vector<1x32x32xf32> to vector<32x32xf32>
    %cst = arith.constant dense<0.000000e+00> : vector<16x32xf32>
    %4 = tpu.matmul %1, %3, %cst {dimension_numbers = #tpu.dot_dimension_numbers<[1], [0], [0], [1], [0, 0, 1, 1], [], []>} : vector<16x32xf32>, vector<32x32xf32>, vector<16x32xf32> -> vector<16x32xf32>
    %c0_5 = arith.constant 0 : index
    %c0_6 = arith.constant 0 : index
    %c0_7 = arith.constant 0 : index
    %5 = vector.load %arg6[%c0_5, %c0_6, %c0_7] : memref<3x1x32xf32, #tpu.memory_space<vmem>>, vector<1x1x32xf32>
    %6 = vector.shape_cast %5 : vector<1x1x32xf32> to vector<1x32xf32>
    %7 = vector.broadcast %6 : vector<1x32xf32> to vector<16x32xf32>
    %8 = arith.addf %4, %7 : vector<16x32xf32>
    %cst_8 = arith.constant 0.353553385 : f32
    %9 = vector.broadcast %cst_8 : f32 to vector<16x32xf32>
    %10 = arith.mulf %8, %9 : vector<16x32xf32>
    %c0_9 = arith.constant 0 : index
    %c0_10 = arith.constant 0 : index
    %c0_11 = arith.constant 0 : index
    %11 = vector.load %arg2[%c0_9, %c0_10, %c0_11] : memref<2x8x32xf32, #tpu.memory_space<vmem>>, vector<2x8x32xf32>
    %12 = vector.shape_cast %11 : vector<2x8x32xf32> to vector<16x32xf32>
    %c1 = arith.constant 1 : index
    %c0_12 = arith.constant 0 : index
    %c0_13 = arith.constant 0 : index
    %13 = vector.load %arg4[%c1, %c0_12, %c0_13] : memref<3x32x32xf32, #tpu.memory_space<vmem>>, vector<1x32x32xf32>
    %14 = vector.shape_cast %13 : vector<1x32x32xf32> to vector<32x32xf32>
    %cst_14 = arith.constant dense<0.000000e+00> : vector<16x32xf32>
    %15 = tpu.matmul %12, %14, %cst_14 {dimension_numbers = #tpu.dot_dimension_numbers<[1], [0], [0], [1], [0, 0, 1, 1], [], []>} : vector<16x32xf32>, vector<32x32xf32>, vector<16x32xf32> -> vector<16x32xf32>
    %c1_15 = arith.constant 1 : index
    %c0_16 = arith.constant 0 : index
    %c0_17 = arith.constant 0 : index
    %16 = vector.load %arg6[%c1_15, %c0_16, %c0_17] : memref<3x1x32xf32, #tpu.memory_space<vmem>>, vector<1x1x32xf32>
    %17 = vector.shape_cast %16 : vector<1x1x32xf32> to vector<1x32xf32>
    %18 = vector.broadcast %17 : vector<1x32xf32> to vector<16x32xf32>
    %19 = arith.addf %15, %18 : vector<16x32xf32>
    %c0_18 = arith.constant 0 : index
    %c0_19 = arith.constant 0 : index
    %c0_20 = arith.constant 0 : index
    %20 = vector.load %arg3[%c0_18, %c0_19, %c0_20] : memref<2x8x32xf32, #tpu.memory_space<vmem>>, vector<2x8x32xf32>
    %21 = vector.shape_cast %20 : vector<2x8x32xf32> to vector<16x32xf32>
    %c2 = arith.constant 2 : index
    %c0_21 = arith.constant 0 : index
    %c0_22 = arith.constant 0 : index
    %22 = vector.load %arg4[%c2, %c0_21, %c0_22] : memref<3x32x32xf32, #tpu.memory_space<vmem>>, vector<1x32x32xf32>
    %23 = vector.shape_cast %22 : vector<1x32x32xf32> to vector<32x32xf32>
    %cst_23 = arith.constant dense<0.000000e+00> : vector<16x32xf32>
    %24 = tpu.matmul %21, %23, %cst_23 {dimension_numbers = #tpu.dot_dimension_numbers<[1], [0], [0], [1], [0, 0, 1, 1], [], []>} : vector<16x32xf32>, vector<32x32xf32>, vector<16x32xf32> -> vector<16x32xf32>
    %c2_24 = arith.constant 2 : index
    %c0_25 = arith.constant 0 : index
    %c0_26 = arith.constant 0 : index
    %25 = vector.load %arg6[%c2_24, %c0_25, %c0_26] : memref<3x1x32xf32, #tpu.memory_space<vmem>>, vector<1x1x32xf32>
    %26 = vector.shape_cast %25 : vector<1x1x32xf32> to vector<1x32xf32>
    %27 = vector.broadcast %26 : vector<1x32xf32> to vector<16x32xf32>
    %28 = arith.addf %24, %27 : vector<16x32xf32>
    %29 = vector.extract_strided_slice %10 {offsets = [0, 0], sizes = [16, 8], strides = [1, 1]} : vector<16x32xf32> to vector<16x8xf32>
    %30 = vector.shape_cast %29 : vector<16x8xf32> to vector<2x8x8xf32>
    %31 = vector.extract_strided_slice %19 {offsets = [0, 0], sizes = [16, 8], strides = [1, 1]} : vector<16x32xf32> to vector<16x8xf32>
    %32 = vector.shape_cast %31 : vector<16x8xf32> to vector<2x8x8xf32>
    %33 = vector.extract_strided_slice %28 {offsets = [0, 0], sizes = [16, 8], strides = [1, 1]} : vector<16x32xf32> to vector<16x8xf32>
    %34 = vector.shape_cast %33 : vector<16x8xf32> to vector<2x8x8xf32>
    %cst_27 = arith.constant dense<0.000000e+00> : vector<2x8x8xf32>
    %35 = tpu.matmul %30, %32, %cst_27 {dimension_numbers = #tpu.dot_dimension_numbers<[2], [2], [1], [1], [0, 0, 0, 1, 1, 1], [0], [0]>} : vector<2x8x8xf32>, vector<2x8x8xf32>, vector<2x8x8xf32> -> vector<2x8x8xf32>
    %cst_28 = arith.constant dense<0xFF800000> : vector<2x8xf32>
    %36 = vector.multi_reduction <maximumf>, %35, %cst_28 [2] : vector<2x8x8xf32> to vector<2x8xf32>
    %37 = vector.shape_cast %36 : vector<2x8xf32> to vector<2x8x1xf32>
    %38 = vector.broadcast %37 : vector<2x8x1xf32> to vector<2x8x8xf32>
    %39 = arith.subf %35, %38 : vector<2x8x8xf32>
    %40 = math.exp %39 : vector<2x8x8xf32>
    %cst_29 = arith.constant dense<0.000000e+00> : vector<2x8xf32>
    %41 = vector.multi_reduction <add>, %40, %cst_29 [2] : vector<2x8x8xf32> to vector<2x8xf32>
    %42 = vector.shape_cast %41 : vector<2x8xf32> to vector<2x8x1xf32>
    %43 = tpu.reciprocal %42 : vector<2x8x1xf32> -> vector<2x8x1xf32>
    %44 = vector.broadcast %43 : vector<2x8x1xf32> to vector<2x8x8xf32>
    %45 = arith.mulf %40, %44 : vector<2x8x8xf32>
    %cst_30 = arith.constant dense<0.000000e+00> : vector<2x8x8xf32>
    %46 = tpu.matmul %45, %34, %cst_30 {dimension_numbers = #tpu.dot_dimension_numbers<[2], [1], [1], [2], [0, 0, 0, 1, 1, 2], [0], [0]>} : vector<2x8x8xf32>, vector<2x8x8xf32>, vector<2x8x8xf32> -> vector<2x8x8xf32>
    %47 = vector.shape_cast %46 : vector<2x8x8xf32> to vector<16x8xf32>
    %c0_31 = arith.constant 0 : index
    %c0_32 = arith.constant 0 : index
    %48 = vector.load %arg9[%c0_31, %c0_32] : memref<16x32xf32, #tpu.memory_space<vmem>>, vector<16x8xf32>
    tpu.vector_store %arg9[%c0_31, %c0_32], %47 {strides = array<i32>} : memref<16x32xf32, #tpu.memory_space<vmem>>, vector<16x8xf32>,
    %49 = vector.extract_strided_slice %10 {offsets = [0, 8], sizes = [16, 8], strides = [1, 1]} : vector<16x32xf32> to vector<16x8xf32>
    %50 = vector.shape_cast %49 : vector<16x8xf32> to vector<2x8x8xf32>
    %51 = vector.extract_strided_slice %19 {offsets = [0, 8], sizes = [16, 8], strides = [1, 1]} : vector<16x32xf32> to vector<16x8xf32>
    %52 = vector.shape_cast %51 : vector<16x8xf32> to vector<2x8x8xf32>
    %53 = vector.extract_strided_slice %28 {offsets = [0, 8], sizes = [16, 8], strides = [1, 1]} : vector<16x32xf32> to vector<16x8xf32>
    %54 = vector.shape_cast %53 : vector<16x8xf32> to vector<2x8x8xf32>
    %cst_33 = arith.constant dense<0.000000e+00> : vector<2x8x8xf32>
    %55 = tpu.matmul %50, %52, %cst_33 {dimension_numbers = #tpu.dot_dimension_numbers<[2], [2], [1], [1], [0, 0, 0, 1, 1, 1], [0], [0]>} : vector<2x8x8xf32>, vector<2x8x8xf32>, vector<2x8x8xf32> -> vector<2x8x8xf32>
    %cst_34 = arith.constant dense<0xFF800000> : vector<2x8xf32>
    %56 = vector.multi_reduction <maximumf>, %55, %cst_34 [2] : vector<2x8x8xf32> to vector<2x8xf32>
    %57 = vector.shape_cast %56 : vector<2x8xf32> to vector<2x8x1xf32>
    %58 = vector.broadcast %57 : vector<2x8x1xf32> to vector<2x8x8xf32>
    %59 = arith.subf %55, %58 : vector<2x8x8xf32>
    %60 = math.exp %59 : vector<2x8x8xf32>
    %cst_35 = arith.constant dense<0.000000e+00> : vector<2x8xf32>
    %61 = vector.multi_reduction <add>, %60, %cst_35 [2] : vector<2x8x8xf32> to vector<2x8xf32>
    %62 = vector.shape_cast %61 : vector<2x8xf32> to vector<2x8x1xf32>
    %63 = tpu.reciprocal %62 : vector<2x8x1xf32> -> vector<2x8x1xf32>
    %64 = vector.broadcast %63 : vector<2x8x1xf32> to vector<2x8x8xf32>
    %65 = arith.mulf %60, %64 : vector<2x8x8xf32>
    %cst_36 = arith.constant dense<0.000000e+00> : vector<2x8x8xf32>
    %66 = tpu.matmul %65, %54, %cst_36 {dimension_numbers = #tpu.dot_dimension_numbers<[2], [1], [1], [2], [0, 0, 0, 1, 1, 2], [0], [0]>} : vector<2x8x8xf32>, vector<2x8x8xf32>, vector<2x8x8xf32> -> vector<2x8x8xf32>
    %67 = vector.shape_cast %66 : vector<2x8x8xf32> to vector<16x8xf32>
    %c0_37 = arith.constant 0 : index
    %c8 = arith.constant 8 : index
    %68 = vector.load %arg9[%c0_37, %c8] : memref<16x32xf32, #tpu.memory_space<vmem>>, vector<16x8xf32>
    tpu.vector_store %arg9[%c0_37, %c8], %67 {strides = array<i32>} : memref<16x32xf32, #tpu.memory_space<vmem>>, vector<16x8xf32>,
    %69 = vector.extract_strided_slice %10 {offsets = [0, 16], sizes = [16, 8], strides = [1, 1]} : vector<16x32xf32> to vector<16x8xf32>
    %70 = vector.shape_cast %69 : vector<16x8xf32> to vector<2x8x8xf32>
    %71 = vector.extract_strided_slice %19 {offsets = [0, 16], sizes = [16, 8], strides = [1, 1]} : vector<16x32xf32> to vector<16x8xf32>
    %72 = vector.shape_cast %71 : vector<16x8xf32> to vector<2x8x8xf32>
    %73 = vector.extract_strided_slice %28 {offsets = [0, 16], sizes = [16, 8], strides = [1, 1]} : vector<16x32xf32> to vector<16x8xf32>
    %74 = vector.shape_cast %73 : vector<16x8xf32> to vector<2x8x8xf32>
    %cst_38 = arith.constant dense<0.000000e+00> : vector<2x8x8xf32>
    %75 = tpu.matmul %70, %72, %cst_38 {dimension_numbers = #tpu.dot_dimension_numbers<[2], [2], [1], [1], [0, 0, 0, 1, 1, 1], [0], [0]>} : vector<2x8x8xf32>, vector<2x8x8xf32>, vector<2x8x8xf32> -> vector<2x8x8xf32>
    %cst_39 = arith.constant dense<0xFF800000> : vector<2x8xf32>
    %76 = vector.multi_reduction <maximumf>, %75, %cst_39 [2] : vector<2x8x8xf32> to vector<2x8xf32>
    %77 = vector.shape_cast %76 : vector<2x8xf32> to vector<2x8x1xf32>
    %78 = vector.broadcast %77 : vector<2x8x1xf32> to vector<2x8x8xf32>
    %79 = arith.subf %75, %78 : vector<2x8x8xf32>
    %80 = math.exp %79 : vector<2x8x8xf32>
    %cst_40 = arith.constant dense<0.000000e+00> : vector<2x8xf32>
    %81 = vector.multi_reduction <add>, %80, %cst_40 [2] : vector<2x8x8xf32> to vector<2x8xf32>
    %82 = vector.shape_cast %81 : vector<2x8xf32> to vector<2x8x1xf32>
    %83 = tpu.reciprocal %82 : vector<2x8x1xf32> -> vector<2x8x1xf32>
    %84 = vector.broadcast %83 : vector<2x8x1xf32> to vector<2x8x8xf32>
    %85 = arith.mulf %80, %84 : vector<2x8x8xf32>
    %cst_41 = arith.constant dense<0.000000e+00> : vector<2x8x8xf32>
    %86 = tpu.matmul %85, %74, %cst_41 {dimension_numbers = #tpu.dot_dimension_numbers<[2], [1], [1], [2], [0, 0, 0, 1, 1, 2], [0], [0]>} : vector<2x8x8xf32>, vector<2x8x8xf32>, vector<2x8x8xf32> -> vector<2x8x8xf32>
    %87 = vector.shape_cast %86 : vector<2x8x8xf32> to vector<16x8xf32>
    %c0_42 = arith.constant 0 : index
    %c16 = arith.constant 16 : index
    %88 = vector.load %arg9[%c0_42, %c16] : memref<16x32xf32, #tpu.memory_space<vmem>>, vector<16x8xf32>
    tpu.vector_store %arg9[%c0_42, %c16], %87 {strides = array<i32>} : memref<16x32xf32, #tpu.memory_space<vmem>>, vector<16x8xf32>,
    %89 = vector.extract_strided_slice %10 {offsets = [0, 24], sizes = [16, 8], strides = [1, 1]} : vector<16x32xf32> to vector<16x8xf32>
    %90 = vector.shape_cast %89 : vector<16x8xf32> to vector<2x8x8xf32>
    %91 = vector.extract_strided_slice %19 {offsets = [0, 24], sizes = [16, 8], strides = [1, 1]} : vector<16x32xf32> to vector<16x8xf32>
    %92 = vector.shape_cast %91 : vector<16x8xf32> to vector<2x8x8xf32>
    %93 = vector.extract_strided_slice %28 {offsets = [0, 24], sizes = [16, 8], strides = [1, 1]} : vector<16x32xf32> to vector<16x8xf32>
    %94 = vector.shape_cast %93 : vector<16x8xf32> to vector<2x8x8xf32>
    %cst_43 = arith.constant dense<0.000000e+00> : vector<2x8x8xf32>
    %95 = tpu.matmul %90, %92, %cst_43 {dimension_numbers = #tpu.dot_dimension_numbers<[2], [2], [1], [1], [0, 0, 0, 1, 1, 1], [0], [0]>} : vector<2x8x8xf32>, vector<2x8x8xf32>, vector<2x8x8xf32> -> vector<2x8x8xf32>
    %cst_44 = arith.constant dense<0xFF800000> : vector<2x8xf32>
    %96 = vector.multi_reduction <maximumf>, %95, %cst_44 [2] : vector<2x8x8xf32> to vector<2x8xf32>
    %97 = vector.shape_cast %96 : vector<2x8xf32> to vector<2x8x1xf32>
    %98 = vector.broadcast %97 : vector<2x8x1xf32> to vector<2x8x8xf32>
    %99 = arith.subf %95, %98 : vector<2x8x8xf32>
    %100 = math.exp %99 : vector<2x8x8xf32>
    %cst_45 = arith.constant dense<0.000000e+00> : vector<2x8xf32>
    %101 = vector.multi_reduction <add>, %100, %cst_45 [2] : vector<2x8x8xf32> to vector<2x8xf32>
    %102 = vector.shape_cast %101 : vector<2x8xf32> to vector<2x8x1xf32>
    %103 = tpu.reciprocal %102 : vector<2x8x1xf32> -> vector<2x8x1xf32>
    %104 = vector.broadcast %103 : vector<2x8x1xf32> to vector<2x8x8xf32>
    %105 = arith.mulf %100, %104 : vector<2x8x8xf32>
    %cst_46 = arith.constant dense<0.000000e+00> : vector<2x8x8xf32>
    %106 = tpu.matmul %105, %94, %cst_46 {dimension_numbers = #tpu.dot_dimension_numbers<[2], [1], [1], [2], [0, 0, 0, 1, 1, 2], [0], [0]>} : vector<2x8x8xf32>, vector<2x8x8xf32>, vector<2x8x8xf32> -> vector<2x8x8xf32>
    %107 = vector.shape_cast %106 : vector<2x8x8xf32> to vector<16x8xf32>
    %c0_47 = arith.constant 0 : index
    %c24 = arith.constant 24 : index
    %108 = vector.load %arg9[%c0_47, %c24] : memref<16x32xf32, #tpu.memory_space<vmem>>, vector<16x8xf32>
    tpu.vector_store %arg9[%c0_47, %c24], %107 {strides = array<i32>} : memref<16x32xf32, #tpu.memory_space<vmem>>, vector<16x8xf32>,
    %c0_48 = arith.constant 0 : index
    %c0_49 = arith.constant 0 : index
    %109 = vector.load %arg9[%c0_48, %c0_49] : memref<16x32xf32, #tpu.memory_space<vmem>>, vector<16x32xf32>
    %c0_50 = arith.constant 0 : index
    %c0_51 = arith.constant 0 : index
    %110 = vector.load %arg5[%c0_50, %c0_51] : memref<32x32xf32, #tpu.memory_space<vmem>>, vector<32x32xf32>
    %cst_52 = arith.constant dense<0.000000e+00> : vector<16x32xf32>
    %111 = tpu.matmul %109, %110, %cst_52 {dimension_numbers = #tpu.dot_dimension_numbers<[1], [0], [0], [1], [0, 0, 1, 1], [], []>} : vector<16x32xf32>, vector<32x32xf32>, vector<16x32xf32> -> vector<16x32xf32>
    %c0_53 = arith.constant 0 : index
    %c0_54 = arith.constant 0 : index
    %112 = vector.load %arg7[%c0_53, %c0_54] : memref<1x32xf32, #tpu.memory_space<vmem>>, vector<1x32xf32>
    %113 = vector.broadcast %112 : vector<1x32xf32> to vector<16x32xf32>
    %114 = arith.addf %111, %113 : vector<16x32xf32>
    %115 = vector.shape_cast %114 : vector<16x32xf32> to vector<2x8x32xf32>
    %c0_55 = arith.constant 0 : index
    %c0_56 = arith.constant 0 : index
    %c0_57 = arith.constant 0 : index
    %116 = vector.load %arg8[%c0_55, %c0_56, %c0_57] : memref<2x8x32xf32, #tpu.memory_space<vmem>>, vector<2x8x32xf32>
    tpu.vector_store %arg8[%c0_55, %c0_56, %c0_57], %115 {strides = array<i32>} : memref<2x8x32xf32, #tpu.memory_space<vmem>>, vector<2x8x32xf32>,
    return
  }
  func.func @transform_0(%arg0: i32) -> (i32, i32, i32) {
    %c0_i32 = arith.constant 0 : i32
    %c0_i32_0 = arith.constant 0 : i32
    %c0_i32_1 = arith.constant 0 : i32
    return %arg0, %c0_i32, %c0_i32_0 : i32, i32, i32
  }
  func.func @transform_1(%arg0: i32) -> (i32, i32, i32) {
    %c0_i32 = arith.constant 0 : i32
    %c0_i32_0 = arith.constant 0 : i32
    %c0_i32_1 = arith.constant 0 : i32
    return %arg0, %c0_i32, %c0_i32_0 : i32, i32, i32
  }
  func.func @transform_2(%arg0: i32) -> (i32, i32, i32) {
    %c0_i32 = arith.constant 0 : i32
    %c0_i32_0 = arith.constant 0 : i32
    %c0_i32_1 = arith.constant 0 : i32
    return %arg0, %c0_i32, %c0_i32_0 : i32, i32, i32
  }
  func.func @transform_3(%arg0: i32) -> (i32, i32, i32) {
    %c0_i32 = arith.constant 0 : i32
    %c0_i32_0 = arith.constant 0 : i32
    %c0_i32_1 = arith.constant 0 : i32
    %c0_i32_2 = arith.constant 0 : i32
    return %c0_i32, %c0_i32_0, %c0_i32_1 : i32, i32, i32
  }
  func.func @transform_4(%arg0: i32) -> (i32, i32) {
    %c0_i32 = arith.constant 0 : i32
    %c0_i32_0 = arith.constant 0 : i32
    %c0_i32_1 = arith.constant 0 : i32
    return %c0_i32, %c0_i32_0 : i32, i32
  }
  func.func @transform_5(%arg0: i32) -> (i32, i32, i32) {
    %c0_i32 = arith.constant 0 : i32
    %c0_i32_0 = arith.constant 0 : i32
    %c0_i32_1 = arith.constant 0 : i32
    %c0_i32_2 = arith.constant 0 : i32
    return %c0_i32, %c0_i32_0, %c0_i32_1 : i32, i32, i32
  }
  func.func @transform_6(%arg0: i32) -> (i32, i32) {
    %c0_i32 = arith.constant 0 : i32
    %c0_i32_0 = arith.constant 0 : i32
    %c0_i32_1 = arith.constant 0 : i32
    return %c0_i32, %c0_i32_0 : i32, i32
  }
  func.func @transform_7(%arg0: i32) -> (i32, i32, i32) {
    %c0_i32 = arith.constant 0 : i32
    %c0_i32_0 = arith.constant 0 : i32
    %c0_i32_1 = arith.constant 0 : i32
    return %arg0, %c0_i32, %c0_i32_0 : i32, i32, i32
  }
}

module attributes {stable_mosaic.version = 11 : i64} {
  func.func @_mha_cross_kernel(%arg0: i32, %arg1: memref<2x8x32xf32, #tpu.memory_space<vmem>>, %arg2: memref<2x8x32xf32, #tpu.memory_space<vmem>>, %arg3: memref<2x8x32xf32, #tpu.memory_space<vmem>>, %arg4: memref<3x32x32xf32, #tpu.memory_space<vmem>>, %arg5: memref<32x32xf32, #tpu.memory_space<vmem>>, %arg6: memref<3x1x32xf32, #tpu.memory_space<vmem>>, %arg7: memref<1x32xf32, #tpu.memory_space<vmem>>, %arg8: memref<2x8x32xf32, #tpu.memory_space<vmem>>, %arg9: memref<16x32xf32, #tpu.memory_space<vmem>>) attributes {dimension_semantics = [#tpu.dimension_semantics<parallel>], iteration_bounds = array<i64: 1>, scalar_prefetch = 0 : i64, scratch_operands = 1 : i64, tpu.core_type = #tpu.core_type<tc>, window_params = [{transform_indices = @transform_0, window_bounds = array<i64: 2, 8, 32>}, {transform_indices = @transform_1, window_bounds = array<i64: 2, 8, 32>}, {transform_indices = @transform_2, window_bounds = array<i64: 2, 8, 32>}, {pipeline_mode = #tpu.pipeline_mode<synchronous>, transform_indices = @transform_3, window_bounds = array<i64: 3, 32, 32>}, {pipeline_mode = #tpu.pipeline_mode<synchronous>, transform_indices = @transform_4, window_bounds = array<i64: 32, 32>}, {pipeline_mode = #tpu.pipeline_mode<synchronous>, transform_indices = @transform_5, window_bounds = array<i64: 3, 1, 32>}, {pipeline_mode = #tpu.pipeline_mode<synchronous>, transform_indices = @transform_6, window_bounds = array<i64: 1, 32>}, {transform_indices = @transform_7, window_bounds = array<i64: 2, 8, 32>}]} {
    %c0 = arith.constant 0 : index
    %c0_0 = arith.constant 0 : index
    %c0_1 = arith.constant 0 : index
    %0 = vector.load %arg1[%c0, %c0_0, %c0_1] : memref<2x8x32xf32, #tpu.memory_space<vmem>>, vector<2x8x32xf32>
    %1 = vector.shape_cast %0 : vector<2x8x32xf32> to vector<16x32xf32>
    %c0_2 = arith.constant 0 : index
    %c0_3 = arith.constant 0 : index
    %c0_4 = arith.constant 0 : index
    %2 = vector.load %arg4[%c0_2, %c0_3, %c0_4] : memref<3x32x32xf32, #tpu.memory_space<vmem>>, vector<1x32x32xf32>
    %3 = vector.shape_cast %2 : vector<1x32x32xf32> to vector<32x32xf32>
    %cst = arith.constant dense<0.000000e+00> : vector<16x32xf32>
    %4 = tpu.matmul %1, %3, %cst {dimension_numbers = #tpu.dot_dimension_numbers<[1], [0], [0], [1], [0, 0, 1, 1], [], []>} : vector<16x32xf32>, vector<32x32xf32>, vector<16x32xf32> -> vector<16x32xf32>
    %c0_5 = arith.constant 0 : index
    %c0_6 = arith.constant 0 : index
    %c0_7 = arith.constant 0 : index
    %5 = vector.load %arg6[%c0_5, %c0_6, %c0_7] : memref<3x1x32xf32, #tpu.memory_space<vmem>>, vector<1x1x32xf32>
    %6 = vector.shape_cast %5 : vector<1x1x32xf32> to vector<1x32xf32>
    %7 = vector.broadcast %6 : vector<1x32xf32> to vector<16x32xf32>
    %8 = arith.addf %4, %7 : vector<16x32xf32>
    %cst_8 = arith.constant 0.353553385 : f32
    %9 = vector.broadcast %cst_8 : f32 to vector<16x32xf32>
    %10 = arith.mulf %8, %9 : vector<16x32xf32>
    %c0_9 = arith.constant 0 : index
    %c0_10 = arith.constant 0 : index
    %c0_11 = arith.constant 0 : index
    %11 = vector.load %arg2[%c0_9, %c0_10, %c0_11] : memref<2x8x32xf32, #tpu.memory_space<vmem>>, vector<2x8x32xf32>
    %12 = vector.shape_cast %11 : vector<2x8x32xf32> to vector<16x32xf32>
    %c1 = arith.constant 1 : index
    %c0_12 = arith.constant 0 : index
    %c0_13 = arith.constant 0 : index
    %13 = vector.load %arg4[%c1, %c0_12, %c0_13] : memref<3x32x32xf32, #tpu.memory_space<vmem>>, vector<1x32x32xf32>
    %14 = vector.shape_cast %13 : vector<1x32x32xf32> to vector<32x32xf32>
    %cst_14 = arith.constant dense<0.000000e+00> : vector<16x32xf32>
    %15 = tpu.matmul %12, %14, %cst_14 {dimension_numbers = #tpu.dot_dimension_numbers<[1], [0], [0], [1], [0, 0, 1, 1], [], []>} : vector<16x32xf32>, vector<32x32xf32>, vector<16x32xf32> -> vector<16x32xf32>
    %c1_15 = arith.constant 1 : index
    %c0_16 = arith.constant 0 : index
    %c0_17 = arith.constant 0 : index
    %16 = vector.load %arg6[%c1_15, %c0_16, %c0_17] : memref<3x1x32xf32, #tpu.memory_space<vmem>>, vector<1x1x32xf32>
    %17 = vector.shape_cast %16 : vector<1x1x32xf32> to vector<1x32xf32>
    %18 = vector.broadcast %17 : vector<1x32xf32> to vector<16x32xf32>
    %19 = arith.addf %15, %18 : vector<16x32xf32>
    %c0_18 = arith.constant 0 : index
    %c0_19 = arith.constant 0 : index
    %c0_20 = arith.constant 0 : index
    %20 = vector.load %arg3[%c0_18, %c0_19, %c0_20] : memref<2x8x32xf32, #tpu.memory_space<vmem>>, vector<2x8x32xf32>
    %21 = vector.shape_cast %20 : vector<2x8x32xf32> to vector<16x32xf32>
    %c2 = arith.constant 2 : index
    %c0_21 = arith.constant 0 : index
    %c0_22 = arith.constant 0 : index
    %22 = vector.load %arg4[%c2, %c0_21, %c0_22] : memref<3x32x32xf32, #tpu.memory_space<vmem>>, vector<1x32x32xf32>
    %23 = vector.shape_cast %22 : vector<1x32x32xf32> to vector<32x32xf32>
    %cst_23 = arith.constant dense<0.000000e+00> : vector<16x32xf32>
    %24 = tpu.matmul %21, %23, %cst_23 {dimension_numbers = #tpu.dot_dimension_numbers<[1], [0], [0], [1], [0, 0, 1, 1], [], []>} : vector<16x32xf32>, vector<32x32xf32>, vector<16x32xf32> -> vector<16x32xf32>
    %c2_24 = arith.constant 2 : index
    %c0_25 = arith.constant 0 : index
    %c0_26 = arith.constant 0 : index
    %25 = vector.load %arg6[%c2_24, %c0_25, %c0_26] : memref<3x1x32xf32, #tpu.memory_space<vmem>>, vector<1x1x32xf32>
    %26 = vector.shape_cast %25 : vector<1x1x32xf32> to vector<1x32xf32>
    %27 = vector.broadcast %26 : vector<1x32xf32> to vector<16x32xf32>
    %28 = arith.addf %24, %27 : vector<16x32xf32>
    %29 = vector.extract_strided_slice %10 {offsets = [0, 0], sizes = [16, 8], strides = [1, 1]} : vector<16x32xf32> to vector<16x8xf32>
    %30 = vector.shape_cast %29 : vector<16x8xf32> to vector<2x8x8xf32>
    %31 = vector.extract_strided_slice %19 {offsets = [0, 0], sizes = [16, 8], strides = [1, 1]} : vector<16x32xf32> to vector<16x8xf32>
    %32 = vector.shape_cast %31 : vector<16x8xf32> to vector<2x8x8xf32>
    %33 = vector.extract_strided_slice %28 {offsets = [0, 0], sizes = [16, 8], strides = [1, 1]} : vector<16x32xf32> to vector<16x8xf32>
    %34 = vector.shape_cast %33 : vector<16x8xf32> to vector<2x8x8xf32>
    %cst_27 = arith.constant dense<0.000000e+00> : vector<2x8x8xf32>
    %35 = tpu.matmul %30, %32, %cst_27 {dimension_numbers = #tpu.dot_dimension_numbers<[2], [2], [1], [1], [0, 0, 0, 1, 1, 1], [0], [0]>} : vector<2x8x8xf32>, vector<2x8x8xf32>, vector<2x8x8xf32> -> vector<2x8x8xf32>
    %cst_28 = arith.constant dense<0xFF800000> : vector<2x8xf32>
    %36 = vector.multi_reduction <maximumf>, %35, %cst_28 [2] : vector<2x8x8xf32> to vector<2x8xf32>
    %37 = vector.shape_cast %36 : vector<2x8xf32> to vector<2x8x1xf32>
    %38 = vector.broadcast %37 : vector<2x8x1xf32> to vector<2x8x8xf32>
    %39 = arith.subf %35, %38 : vector<2x8x8xf32>
    %40 = math.exp %39 : vector<2x8x8xf32>
    %cst_29 = arith.constant dense<0.000000e+00> : vector<2x8xf32>
    %41 = vector.multi_reduction <add>, %40, %cst_29 [2] : vector<2x8x8xf32> to vector<2x8xf32>
    %42 = vector.shape_cast %41 : vector<2x8xf32> to vector<2x8x1xf32>
    %43 = tpu.reciprocal %42 : vector<2x8x1xf32> -> vector<2x8x1xf32>
    %44 = vector.broadcast %43 : vector<2x8x1xf32> to vector<2x8x8xf32>
    %45 = arith.mulf %40, %44 : vector<2x8x8xf32>
    %cst_30 = arith.constant dense<0.000000e+00> : vector<2x8x8xf32>
    %46 = tpu.matmul %45, %34, %cst_30 {dimension_numbers = #tpu.dot_dimension_numbers<[2], [1], [1], [2], [0, 0, 0, 1, 1, 2], [0], [0]>} : vector<2x8x8xf32>, vector<2x8x8xf32>, vector<2x8x8xf32> -> vector<2x8x8xf32>
    %47 = vector.shape_cast %46 : vector<2x8x8xf32> to vector<16x8xf32>
    %c0_31 = arith.constant 0 : index
    %c0_32 = arith.constant 0 : index
    %48 = vector.load %arg9[%c0_31, %c0_32] : memref<16x32xf32, #tpu.memory_space<vmem>>, vector<16x8xf32>
    tpu.vector_store %arg9[%c0_31, %c0_32], %47 {strides = array<i32>} : memref<16x32xf32, #tpu.memory_space<vmem>>, vector<16x8xf32>,
    %49 = vector.extract_strided_slice %10 {offsets = [0, 8], sizes = [16, 8], strides = [1, 1]} : vector<16x32xf32> to vector<16x8xf32>
    %50 = vector.shape_cast %49 : vector<16x8xf32> to vector<2x8x8xf32>
    %51 = vector.extract_strided_slice %19 {offsets = [0, 8], sizes = [16, 8], strides = [1, 1]} : vector<16x32xf32> to vector<16x8xf32>
    %52 = vector.shape_cast %51 : vector<16x8xf32> to vector<2x8x8xf32>
    %53 = vector.extract_strided_slice %28 {offsets = [0, 8], sizes = [16, 8], strides = [1, 1]} : vector<16x32xf32> to vector<16x8xf32>
    %54 = vector.shape_cast %53 : vector<16x8xf32> to vector<2x8x8xf32>
    %cst_33 = arith.constant dense<0.000000e+00> : vector<2x8x8xf32>
    %55 = tpu.matmul %50, %52, %cst_33 {dimension_numbers = #tpu.dot_dimension_numbers<[2], [2], [1], [1], [0, 0, 0, 1, 1, 1], [0], [0]>} : vector<2x8x8xf32>, vector<2x8x8xf32>, vector<2x8x8xf32> -> vector<2x8x8xf32>
    %cst_34 = arith.constant dense<0xFF800000> : vector<2x8xf32>
    %56 = vector.multi_reduction <maximumf>, %55, %cst_34 [2] : vector<2x8x8xf32> to vector<2x8xf32>
    %57 = vector.shape_cast %56 : vector<2x8xf32> to vector<2x8x1xf32>
    %58 = vector.broadcast %57 : vector<2x8x1xf32> to vector<2x8x8xf32>
    %59 = arith.subf %55, %58 : vector<2x8x8xf32>
    %60 = math.exp %59 : vector<2x8x8xf32>
    %cst_35 = arith.constant dense<0.000000e+00> : vector<2x8xf32>
    %61 = vector.multi_reduction <add>, %60, %cst_35 [2] : vector<2x8x8xf32> to vector<2x8xf32>
    %62 = vector.shape_cast %61 : vector<2x8xf32> to vector<2x8x1xf32>
    %63 = tpu.reciprocal %62 : vector<2x8x1xf32> -> vector<2x8x1xf32>
    %64 = vector.broadcast %63 : vector<2x8x1xf32> to vector<2x8x8xf32>
    %65 = arith.mulf %60, %64 : vector<2x8x8xf32>
    %cst_36 = arith.constant dense<0.000000e+00> : vector<2x8x8xf32>
    %66 = tpu.matmul %65, %54, %cst_36 {dimension_numbers = #tpu.dot_dimension_numbers<[2], [1], [1], [2], [0, 0, 0, 1, 1, 2], [0], [0]>} : vector<2x8x8xf32>, vector<2x8x8xf32>, vector<2x8x8xf32> -> vector<2x8x8xf32>
    %67 = vector.shape_cast %66 : vector<2x8x8xf32> to vector<16x8xf32>
    %c0_37 = arith.constant 0 : index
    %c8 = arith.constant 8 : index
    %68 = vector.load %arg9[%c0_37, %c8] : memref<16x32xf32, #tpu.memory_space<vmem>>, vector<16x8xf32>
    tpu.vector_store %arg9[%c0_37, %c8], %67 {strides = array<i32>} : memref<16x32xf32, #tpu.memory_space<vmem>>, vector<16x8xf32>,
    %69 = vector.extract_strided_slice %10 {offsets = [0, 16], sizes = [16, 8], strides = [1, 1]} : vector<16x32xf32> to vector<16x8xf32>
    %70 = vector.shape_cast %69 : vector<16x8xf32> to vector<2x8x8xf32>
    %71 = vector.extract_strided_slice %19 {offsets = [0, 16], sizes = [16, 8], strides = [1, 1]} : vector<16x32xf32> to vector<16x8xf32>
    %72 = vector.shape_cast %71 : vector<16x8xf32> to vector<2x8x8xf32>
    %73 = vector.extract_strided_slice %28 {offsets = [0, 16], sizes = [16, 8], strides = [1, 1]} : vector<16x32xf32> to vector<16x8xf32>
    %74 = vector.shape_cast %73 : vector<16x8xf32> to vector<2x8x8xf32>
    %cst_38 = arith.constant dense<0.000000e+00> : vector<2x8x8xf32>
    %75 = tpu.matmul %70, %72, %cst_38 {dimension_numbers = #tpu.dot_dimension_numbers<[2], [2], [1], [1], [0, 0, 0, 1, 1, 1], [0], [0]>} : vector<2x8x8xf32>, vector<2x8x8xf32>, vector<2x8x8xf32> -> vector<2x8x8xf32>
    %cst_39 = arith.constant dense<0xFF800000> : vector<2x8xf32>
    %76 = vector.multi_reduction <maximumf>, %75, %cst_39 [2] : vector<2x8x8xf32> to vector<2x8xf32>
    %77 = vector.shape_cast %76 : vector<2x8xf32> to vector<2x8x1xf32>
    %78 = vector.broadcast %77 : vector<2x8x1xf32> to vector<2x8x8xf32>
    %79 = arith.subf %75, %78 : vector<2x8x8xf32>
    %80 = math.exp %79 : vector<2x8x8xf32>
    %cst_40 = arith.constant dense<0.000000e+00> : vector<2x8xf32>
    %81 = vector.multi_reduction <add>, %80, %cst_40 [2] : vector<2x8x8xf32> to vector<2x8xf32>
    %82 = vector.shape_cast %81 : vector<2x8xf32> to vector<2x8x1xf32>
    %83 = tpu.reciprocal %82 : vector<2x8x1xf32> -> vector<2x8x1xf32>
    %84 = vector.broadcast %83 : vector<2x8x1xf32> to vector<2x8x8xf32>
    %85 = arith.mulf %80, %84 : vector<2x8x8xf32>
    %cst_41 = arith.constant dense<0.000000e+00> : vector<2x8x8xf32>
    %86 = tpu.matmul %85, %74, %cst_41 {dimension_numbers = #tpu.dot_dimension_numbers<[2], [1], [1], [2], [0, 0, 0, 1, 1, 2], [0], [0]>} : vector<2x8x8xf32>, vector<2x8x8xf32>, vector<2x8x8xf32> -> vector<2x8x8xf32>
    %87 = vector.shape_cast %86 : vector<2x8x8xf32> to vector<16x8xf32>
    %c0_42 = arith.constant 0 : index
    %c16 = arith.constant 16 : index
    %88 = vector.load %arg9[%c0_42, %c16] : memref<16x32xf32, #tpu.memory_space<vmem>>, vector<16x8xf32>
    tpu.vector_store %arg9[%c0_42, %c16], %87 {strides = array<i32>} : memref<16x32xf32, #tpu.memory_space<vmem>>, vector<16x8xf32>,
    %89 = vector.extract_strided_slice %10 {offsets = [0, 24], sizes = [16, 8], strides = [1, 1]} : vector<16x32xf32> to vector<16x8xf32>
    %90 = vector.shape_cast %89 : vector<16x8xf32> to vector<2x8x8xf32>
    %91 = vector.extract_strided_slice %19 {offsets = [0, 24], sizes = [16, 8], strides = [1, 1]} : vector<16x32xf32> to vector<16x8xf32>
    %92 = vector.shape_cast %91 : vector<16x8xf32> to vector<2x8x8xf32>
    %93 = vector.extract_strided_slice %28 {offsets = [0, 24], sizes = [16, 8], strides = [1, 1]} : vector<16x32xf32> to vector<16x8xf32>
    %94 = vector.shape_cast %93 : vector<16x8xf32> to vector<2x8x8xf32>
    %cst_43 = arith.constant dense<0.000000e+00> : vector<2x8x8xf32>
    %95 = tpu.matmul %90, %92, %cst_43 {dimension_numbers = #tpu.dot_dimension_numbers<[2], [2], [1], [1], [0, 0, 0, 1, 1, 1], [0], [0]>} : vector<2x8x8xf32>, vector<2x8x8xf32>, vector<2x8x8xf32> -> vector<2x8x8xf32>
    %cst_44 = arith.constant dense<0xFF800000> : vector<2x8xf32>
    %96 = vector.multi_reduction <maximumf>, %95, %cst_44 [2] : vector<2x8x8xf32> to vector<2x8xf32>
    %97 = vector.shape_cast %96 : vector<2x8xf32> to vector<2x8x1xf32>
    %98 = vector.broadcast %97 : vector<2x8x1xf32> to vector<2x8x8xf32>
    %99 = arith.subf %95, %98 : vector<2x8x8xf32>
    %100 = math.exp %99 : vector<2x8x8xf32>
    %cst_45 = arith.constant dense<0.000000e+00> : vector<2x8xf32>
    %101 = vector.multi_reduction <add>, %100, %cst_45 [2] : vector<2x8x8xf32> to vector<2x8xf32>
    %102 = vector.shape_cast %101 : vector<2x8xf32> to vector<2x8x1xf32>
    %103 = tpu.reciprocal %102 : vector<2x8x1xf32> -> vector<2x8x1xf32>
    %104 = vector.broadcast %103 : vector<2x8x1xf32> to vector<2x8x8xf32>
    %105 = arith.mulf %100, %104 : vector<2x8x8xf32>
    %cst_46 = arith.constant dense<0.000000e+00> : vector<2x8x8xf32>
    %106 = tpu.matmul %105, %94, %cst_46 {dimension_numbers = #tpu.dot_dimension_numbers<[2], [1], [1], [2], [0, 0, 0, 1, 1, 2], [0], [0]>} : vector<2x8x8xf32>, vector<2x8x8xf32>, vector<2x8x8xf32> -> vector<2x8x8xf32>
    %107 = vector.shape_cast %106 : vector<2x8x8xf32> to vector<16x8xf32>
    %c0_47 = arith.constant 0 : index
    %c24 = arith.constant 24 : index
    %108 = vector.load %arg9[%c0_47, %c24] : memref<16x32xf32, #tpu.memory_space<vmem>>, vector<16x8xf32>
    tpu.vector_store %arg9[%c0_47, %c24], %107 {strides = array<i32>} : memref<16x32xf32, #tpu.memory_space<vmem>>, vector<16x8xf32>,
    %c0_48 = arith.constant 0 : index
    %c0_49 = arith.constant 0 : index
    %109 = vector.load %arg9[%c0_48, %c0_49] : memref<16x32xf32, #tpu.memory_space<vmem>>, vector<16x32xf32>
    %c0_50 = arith.constant 0 : index
    %c0_51 = arith.constant 0 : index
    %110 = vector.load %arg5[%c0_50, %c0_51] : memref<32x32xf32, #tpu.memory_space<vmem>>, vector<32x32xf32>
    %cst_52 = arith.constant dense<0.000000e+00> : vector<16x32xf32>
    %111 = tpu.matmul %109, %110, %cst_52 {dimension_numbers = #tpu.dot_dimension_numbers<[1], [0], [0], [1], [0, 0, 1, 1], [], []>} : vector<16x32xf32>, vector<32x32xf32>, vector<16x32xf32> -> vector<16x32xf32>
    %c0_53 = arith.constant 0 : index
    %c0_54 = arith.constant 0 : index
    %112 = vector.load %arg7[%c0_53, %c0_54] : memref<1x32xf32, #tpu.memory_space<vmem>>, vector<1x32xf32>
    %113 = vector.broadcast %112 : vector<1x32xf32> to vector<16x32xf32>
    %114 = arith.addf %111, %113 : vector<16x32xf32>
    %115 = vector.shape_cast %114 : vector<16x32xf32> to vector<2x8x32xf32>
    %c0_55 = arith.constant 0 : index
    %c0_56 = arith.constant 0 : index
    %c0_57 = arith.constant 0 : index
    %116 = vector.load %arg8[%c0_55, %c0_56, %c0_57] : memref<2x8x32xf32, #tpu.memory_space<vmem>>, vector<2x8x32xf32>
    tpu.vector_store %arg8[%c0_55, %c0_56, %c0_57], %115 {strides = array<i32>} : memref<2x8x32xf32, #tpu.memory_space<vmem>>, vector<2x8x32xf32>,
    return
  }
  func.func @transform_0(%arg0: i32) -> (i32, i32, i32) {
    %c0_i32 = arith.constant 0 : i32
    %c0_i32_0 = arith.constant 0 : i32
    %c0_i32_1 = arith.constant 0 : i32
    return %arg0, %c0_i32, %c0_i32_0 : i32, i32, i32
  }
  func.func @transform_1(%arg0: i32) -> (i32, i32, i32) {
    %c0_i32 = arith.constant 0 : i32
    %c0_i32_0 = arith.constant 0 : i32
    %c0_i32_1 = arith.constant 0 : i32
    return %arg0, %c0_i32, %c0_i32_0 : i32, i32, i32
  }
  func.func @transform_2(%arg0: i32) -> (i32, i32, i32) {
    %c0_i32 = arith.constant 0 : i32
    %c0_i32_0 = arith.constant 0 : i32
    %c0_i32_1 = arith.constant 0 : i32
    return %arg0, %c0_i32, %c0_i32_0 : i32, i32, i32
  }
  func.func @transform_3(%arg0: i32) -> (i32, i32, i32) {
    %c0_i32 = arith.constant 0 : i32
    %c0_i32_0 = arith.constant 0 : i32
    %c0_i32_1 = arith.constant 0 : i32
    %c0_i32_2 = arith.constant 0 : i32
    return %c0_i32, %c0_i32_0, %c0_i32_1 : i32, i32, i32
  }
  func.func @transform_4(%arg0: i32) -> (i32, i32) {
    %c0_i32 = arith.constant 0 : i32
    %c0_i32_0 = arith.constant 0 : i32
    %c0_i32_1 = arith.constant 0 : i32
    return %c0_i32, %c0_i32_0 : i32, i32
  }
  func.func @transform_5(%arg0: i32) -> (i32, i32, i32) {
    %c0_i32 = arith.constant 0 : i32
    %c0_i32_0 = arith.constant 0 : i32
    %c0_i32_1 = arith.constant 0 : i32
    %c0_i32_2 = arith.constant 0 : i32
    return %c0_i32, %c0_i32_0, %c0_i32_1 : i32, i32, i32
  }
  func.func @transform_6(%arg0: i32) -> (i32, i32) {
    %c0_i32 = arith.constant 0 : i32
    %c0_i32_0 = arith.constant 0 : i32
    %c0_i32_1 = arith.constant 0 : i32
    return %c0_i32, %c0_i32_0 : i32, i32
  }
  func.func @transform_7(%arg0: i32) -> (i32, i32, i32) {
    %c0_i32 = arith.constant 0 : i32
    %c0_i32_0 = arith.constant 0 : i32
    %c0_i32_1 = arith.constant 0 : i32
    return %arg0, %c0_i32, %c0_i32_0 : i32, i32, i32
  }
}

</mosaic_0001>

<llo_original>
// kernel: tpu_custom_call.1
$region0: #{tpu_custom_call.1}
  #allocation0 [shape = 'u32[]', space=smem, size = 0x4, offset = 0x4, fixed_abs, tag = 'smem constant byte address 0x4 - core index']
  #allocation1 [shape = 'u32[72,128]{1,0:T(1,128)}', space=vmem, size = 0x9000, scoped, tag = 'internal scratch']
  #allocation2 [shape = 'f32[16,32]{1,0:T(8,128)}', space=vmem, size = 0x2000, scoped, tag = 'scratch operand']
  %s0 = inlined_call_operand.hbm [shape: f32[2,8,32], index: 0, kind: input, shape index: {}]
  %s1 = inlined_call_operand.hbm [shape: f32[2,8,32], index: 1, kind: input, shape index: {}]
  %s2 = inlined_call_operand.hbm [shape: f32[2,8,32], index: 2, kind: input, shape index: {}]
  %s3 = inlined_call_operand.hbm [shape: f32[3,32,32], index: 3, kind: input, shape index: {}]
  %s4 = inlined_call_operand.hbm [shape: f32[32,32], index: 4, kind: input, shape index: {}]
  %s5 = inlined_call_operand.vmem [shape: f32[3,1,32], index: 5, kind: input, shape index: {}]
  %s6 = inlined_call_operand.vmem [shape: f32[1,32], index: 6, kind: input, shape index: {}]
  %s7 = inlined_call_operand.hbm [shape: f32[2,8,32], index: 7, kind: output, shape index: {}]
  %s8 = sld [smem:[#allocation0]]
  $region58: #{tpu_custom_call.1} parent=0
    _
  %s10 = ssub.s32 1, %s8
  %s11 = scalar_select 0, %s10, %s8
  $region1: #{tpu_custom_call.1} parent=0
    #allocation3 [shape = 'u8[8192]{0}', space=vmem, size = 0x2000, scoped, tag = 'input window, operand 0, single buffered']
    #allocation4 [shape = 's32[1]{0}', space=sflag, size = 0x4, scoped, tag = 'scoped memory for tpu_custom_call.1']
    #allocation5 [shape = 's32[1]{0}', space=sflag, size = 0x4, scoped, tag = 'scoped memory for tpu_custom_call.1']
    #allocation6 [shape = 'u8[8192]{0}', space=vmem, size = 0x2000, scoped, tag = 'input window, operand 1, single buffered']
    #allocation7 [shape = 's32[1]{0}', space=sflag, size = 0x4, scoped, tag = 'scoped memory for tpu_custom_call.1']
    #allocation8 [shape = 'u8[8192]{0}', space=vmem, size = 0x2000, scoped, tag = 'input window, operand 2, single buffered']
    #allocation9 [shape = 'u8[49152]{0}', space=vmem, size = 0xc000, scoped, tag = 'input window, operand 3, single buffered']
    #allocation10 [shape = 's32[1]{0}', space=sflag, size = 0x4, scoped, tag = 'scoped memory for tpu_custom_call.1']
    #allocation11 [shape = 'u8[16384]{0}', space=vmem, size = 0x4000, scoped, tag = 'input window, operand 4, single buffered']
    #allocation12 [shape = 'u8[8192]{0}', space=vmem, size = 0x2000, scoped, tag = 'output window, operand 0, single buffered']
    %12 = vsyncpa [#allocation4], 0
    %13 = vsyncpa [#allocation7], 0
    %14 = vsyncpa [#allocation10], 0
    %15 = vsyncpa [#allocation5], 0
    // Predicated region
    $region2: #{tpu_custom_call.1} parent=1 // pred_check
      _
    $region3: #{tpu_custom_call.1} parent=1 // pred_check_branch
      %17 = sbr.rel (0) target = $region5
    $region4: #{tpu_custom_call.1} parent=1 // pred_region
      %19 = vsyncadd [#allocation4], 0
      %s20 = sshll.u32 %s0, 4
      %s21 = int_to_ptr.hbm [resolvable:$true] %s20
      %s22 = sshll.u32 [#allocation3], 4
      %s23 = int_to_ptr.vmem [resolvable:$true] %s22
      %28 = dma.hbm_to_vmem [thread:$0]  %s21, 256, %s23, [#allocation4], 128, 128, 8
    $region5: #{tpu_custom_call.1} parent=1 // pred_fallthru
      _
    // Predicated region
    $region6: #{tpu_custom_call.1} parent=1 // pred_check
      _
    $region7: #{tpu_custom_call.1} parent=1 // pred_check_branch
      %30 = sbr.rel (0) target = $region9
    $region8: #{tpu_custom_call.1} parent=1 // pred_region
      %32 = vsyncadd [#allocation7], 0
      %s33 = sshll.u32 %s1, 4
      %s34 = int_to_ptr.hbm [resolvable:$true] %s33
      %s35 = sshll.u32 [#allocation6], 4
      %s36 = int_to_ptr.vmem [resolvable:$true] %s35
      %41 = dma.hbm_to_vmem [thread:$0]  %s34, 256, %s36, [#allocation7], 128, 128, 8
    $region9: #{tpu_custom_call.1} parent=1 // pred_fallthru
      _
    // Predicated region
    $region10: #{tpu_custom_call.1} parent=1 // pred_check
      _
    $region11: #{tpu_custom_call.1} parent=1 // pred_check_branch
      %43 = sbr.rel (0) target = $region13
    $region12: #{tpu_custom_call.1} parent=1 // pred_region
      %45 = vsyncadd [#allocation7], 0
      %s46 = sshll.u32 %s2, 4
      %s47 = int_to_ptr.hbm [resolvable:$true] %s46
      %s48 = sshll.u32 [#allocation8], 4
      %s49 = int_to_ptr.vmem [resolvable:$true] %s48
      %54 = dma.hbm_to_vmem [thread:$0]  %s47, 256, %s49, [#allocation7], 128, 128, 8
    $region13: #{tpu_custom_call.1} parent=1 // pred_fallthru
      _
    // Predicated region
    $region14: #{tpu_custom_call.1} parent=1 // pred_check
      _
    $region15: #{tpu_custom_call.1} parent=1 // pred_check_branch
      %56 = sbr.rel (0) target = $region17
    $region16: #{tpu_custom_call.1} parent=1 // pred_region
      %58 = vsyncadd [#allocation10], 0
      %s59 = sshll.u32 %s3, 4
      %s60 = int_to_ptr.hbm [resolvable:$true] %s59
      %s61 = sshll.u32 [#allocation9], 4
      %s62 = int_to_ptr.vmem [resolvable:$true] %s61
      %67 = dma.hbm_to_vmem [thread:$0]  %s60, 1536, %s62, [#allocation10], 128, 128, 8
    $region17: #{tpu_custom_call.1} parent=1 // pred_fallthru
      _
    // Predicated region
    $region18: #{tpu_custom_call.1} parent=1 // pred_check
      _
    $region19: #{tpu_custom_call.1} parent=1 // pred_check_branch
      %69 = sbr.rel (0) target = $region21
    $region20: #{tpu_custom_call.1} parent=1 // pred_region
      %71 = vsyncadd [#allocation10], 0
      %s72 = sshll.u32 %s4, 4
      %s73 = int_to_ptr.hbm [resolvable:$true] %s72
      %s74 = sshll.u32 [#allocation11], 4
      %s75 = int_to_ptr.vmem [resolvable:$true] %s74
      %80 = dma.hbm_to_vmem [thread:$0]  %s73, 512, %s75, [#allocation10], 128, 128, 8
    $region21: #{tpu_custom_call.1} parent=1 // pred_fallthru
      _
    // Predicated region
    $region22: #{tpu_custom_call.1} parent=1 // pred_check
      _
    $region23: #{tpu_custom_call.1} parent=1 // pred_check_branch
      %82 = sbr.rel (0) target = $region25
    $region24: #{tpu_custom_call.1} parent=1 // pred_region
      _
    $region25: #{tpu_custom_call.1} parent=1 // pred_fallthru
      _
    // Predicated region
    $region26: #{tpu_custom_call.1} parent=1 // pred_check
      _
    $region27: #{tpu_custom_call.1} parent=1 // pred_check_branch
      %84 = sbr.rel (0) target = $region29
    $region28: #{tpu_custom_call.1} parent=1 // pred_region
      _
    $region29: #{tpu_custom_call.1} parent=1 // pred_fallthru
      _
    // Predicated region
    $region30: #{tpu_custom_call.1} parent=1 // pred_check
      _
    $region31: #{tpu_custom_call.1} parent=1 // pred_check_branch
      %86 = sbr.rel (0) target = $region33
    $region32: #{tpu_custom_call.1} parent=1 // pred_region
      %88 = dma.done [#allocation4], 256
    $region33: #{tpu_custom_call.1} parent=1 // pred_fallthru
      _
    // Predicated region
    $region34: #{tpu_custom_call.1} parent=1 // pred_check
      _
    $region35: #{tpu_custom_call.1} parent=1 // pred_check_branch
      %90 = sbr.rel (0) target = $region37
    $region36: #{tpu_custom_call.1} parent=1 // pred_region
      %92 = dma.done [#allocation7], 256
    $region37: #{tpu_custom_call.1} parent=1 // pred_fallthru
      _
    // Predicated region
    $region38: #{tpu_custom_call.1} parent=1 // pred_check
      _
    $region39: #{tpu_custom_call.1} parent=1 // pred_check_branch
      %94 = sbr.rel (0) target = $region41
    $region40: #{tpu_custom_call.1} parent=1 // pred_region
      %96 = dma.done [#allocation7], 256
    $region41: #{tpu_custom_call.1} parent=1 // pred_fallthru
      _
    // Predicated region
    $region42: #{tpu_custom_call.1} parent=1 // pred_check
      _
    $region43: #{tpu_custom_call.1} parent=1 // pred_check_branch
      %98 = sbr.rel (0) target = $region45
    $region44: #{tpu_custom_call.1} parent=1 // pred_region
      %100 = dma.done [#allocation10], 1536
    $region45: #{tpu_custom_call.1} parent=1 // pred_fallthru
      _
    // Predicated region
    $region46: #{tpu_custom_call.1} parent=1 // pred_check
      _
    $region47: #{tpu_custom_call.1} parent=1 // pred_check_branch
      %102 = sbr.rel (0) target = $region49
    $region48: #{tpu_custom_call.1} parent=1 // pred_region
      %104 = dma.done [#allocation10], 512
    $region49: #{tpu_custom_call.1} parent=1 // pred_fallthru
      _
    %v105 = vld [vmem:[#allocation3] sm:$0xff]
    %v106 = vld [vmem:[#allocation3 + $0x8] sm:$0xff]
    %v107 = vld [vmem:[#allocation9] sm:$0xff]
    %v108 = vld [vmem:[#allocation9 + $0x8] sm:$0xff]
    %v109 = vld [vmem:[#allocation9 + $0x10] sm:$0xff]
    %v110 = vld [vmem:[#allocation9 + $0x18] sm:$0xff]
    %v111 = vld [vmem:[%s5] sm:$0x1]
    %v113 = vperm.slane %v111, 0
    %vm115 = vcmask 261120
    %v117 = vsel %vm115, %v105, 0
    %v120 = vsel %vm115, %v106, 0
    %122 = vmatpush.msra.mxu0 0.0
    %123 = vmatpush.msra.mxu0 0.0
    %124 = vmatpush.msra.mxu0 0.0
    %125 = vmatpush.msra.mxu0 0.0
    %126 = vmatpush.msra.mxu0 0.0
    %127 = vmatpush.msra.mxu0 0.0
    %128 = vmatpush.msra.mxu0 0.0
    %129 = vmatpush.msra.mxu0 0.0
    %130 = vmatpush.msra.mxu0 0.0
    %131 = vmatpush.msra.mxu0 0.0
    %132 = vmatpush.msra.mxu0 0.0
    %133 = vmatpush.msra.mxu0 0.0
    %134 = vmatpush.msra.mxu0 %v110
    %135 = vmatpush.msra.mxu0 %v109
    %136 = vmatpush.msra.mxu0 %v108
    %137 = vmatpush.msra.mxu0 %v107
    %138 = vmatmul.f32.gmra.mxu0 %v117
    %v139 = vpop.f32.mrf.mxu0
    %v140 = vadd.f32 %v113, %v139
    %141 = vmatmul.f32.gmra.mxu0 %v120
    %v142 = vpop.f32.mrf.mxu0
    %v143 = vadd.f32 %v113, %v142
    %144 = vdwg.mxu0
    %v145 = vmul.f32 %v140, 0.35355338
    %v146 = vmul.f32 %v143, 0.35355338
    %v147 = vld [vmem:[#allocation6] sm:$0xff]
    %v148 = vld [vmem:[#allocation6 + $0x8] sm:$0xff]
    %s149 = scalar_lea.vmem [#allocation9], 32
    %v150 = vld [vmem:[%s149] sm:$0xff]
    %v151 = vld [vmem:[%s149 + $0x8] sm:$0xff]
    %v152 = vld [vmem:[%s149 + $0x10] sm:$0xff]
    %v153 = vld [vmem:[%s149 + $0x18] sm:$0xff]
    %s154 = scalar_lea.vmem %s5, 1
    %v155 = vld [vmem:[%s154] sm:$0x1]
    %v157 = vperm.slane %v155, 0
    %v160 = vsel %vm115, %v147, 0
    %v163 = vsel %vm115, %v148, 0
    %165 = vmatpush.msra.mxu0 0.0
    %166 = vmatpush.msra.mxu0 0.0
    %167 = vmatpush.msra.mxu0 0.0
    %168 = vmatpush.msra.mxu0 0.0
    %169 = vmatpush.msra.mxu0 0.0
    %170 = vmatpush.msra.mxu0 0.0
    %171 = vmatpush.msra.mxu0 0.0
    %172 = vmatpush.msra.mxu0 0.0
    %173 = vmatpush.msra.mxu0 0.0
    %174 = vmatpush.msra.mxu0 0.0
    %175 = vmatpush.msra.mxu0 0.0
    %176 = vmatpush.msra.mxu0 0.0
    %177 = vmatpush.msra.mxu0 %v153
    %178 = vmatpush.msra.mxu0 %v152
    %179 = vmatpush.msra.mxu0 %v151
    %180 = vmatpush.msra.mxu0 %v150
    %181 = vmatmul.f32.gmra.mxu0 %v160
    %v182 = vpop.f32.mrf.mxu0
    %v183 = vadd.f32 %v157, %v182
    %184 = vmatmul.f32.gmra.mxu0 %v163
    %v185 = vpop.f32.mrf.mxu0
    %v186 = vadd.f32 %v157, %v185
    %187 = vdwg.mxu0
    %v188 = vld [vmem:[#allocation8] sm:$0xff]
    %v189 = vld [vmem:[#allocation8 + $0x8] sm:$0xff]
    %s190 = scalar_lea.vmem [#allocation9], 64
    %v191 = vld [vmem:[%s190] sm:$0xff]
    %v192 = vld [vmem:[%s190 + $0x8] sm:$0xff]
    %v193 = vld [vmem:[%s190 + $0x10] sm:$0xff]
    %v194 = vld [vmem:[%s190 + $0x18] sm:$0xff]
    %s195 = scalar_lea.vmem %s5, 2
    %v196 = vld [vmem:[%s195] sm:$0x1]
    %v198 = vperm.slane %v196, 0
    %v201 = vsel %vm115, %v188, 0
    %v204 = vsel %vm115, %v189, 0
    %206 = vmatpush.msra.mxu0 0.0
    %207 = vmatpush.msra.mxu0 0.0
    %208 = vmatpush.msra.mxu0 0.0
    %209 = vmatpush.msra.mxu0 0.0
    %210 = vmatpush.msra.mxu0 0.0
    %211 = vmatpush.msra.mxu0 0.0
    %212 = vmatpush.msra.mxu0 0.0
    %213 = vmatpush.msra.mxu0 0.0
    %214 = vmatpush.msra.mxu0 0.0
    %215 = vmatpush.msra.mxu0 0.0
    %216 = vmatpush.msra.mxu0 0.0
    %217 = vmatpush.msra.mxu0 0.0
    %218 = vmatpush.msra.mxu0 %v194
    %219 = vmatpush.msra.mxu0 %v193
    %220 = vmatpush.msra.mxu0 %v192
    %221 = vmatpush.msra.mxu0 %v191
    %222 = vmatmul.f32.gmra.mxu0 %v201
    %v223 = vpop.f32.mrf.mxu0
    %v224 = vadd.f32 %v198, %v223
    %225 = vmatmul.f32.gmra.mxu0 %v204
    %v226 = vpop.f32.mrf.mxu0
    %v227 = vadd.f32 %v198, %v226
    %228 = vdwg.mxu0
    %vm229 = vcmask 64512
    %v231 = vsel %vm229, %v145, 0
    %v234 = vsel %vm229, %v183, 0
    %236 = vmatpush.xpose.msra.mxu0 0.0
    %237 = vmatpush.xpose.msra.mxu0 0.0
    %238 = vmatpush.xpose.msra.mxu0 0.0
    %239 = vmatpush.xpose.msra.mxu0 0.0
    %240 = vmatpush.xpose.msra.mxu0 0.0
    %241 = vmatpush.xpose.msra.mxu0 0.0
    %242 = vmatpush.xpose.msra.mxu0 0.0
    %243 = vmatpush.xpose.msra.mxu0 0.0
    %244 = vmatpush.xpose.msra.mxu0 0.0
    %245 = vmatpush.xpose.msra.mxu0 0.0
    %246 = vmatpush.xpose.msra.mxu0 0.0
    %247 = vmatpush.xpose.msra.mxu0 0.0
    %248 = vmatpush.xpose.msra.mxu0 0.0
    %249 = vmatpush.xpose.msra.mxu0 0.0
    %250 = vmatpush.xpose.msra.mxu0 0.0
    %251 = vmatpush.xpose.msra.mxu0 %v234
    %252 = vmatmul.f32.gmra.mxu0 %v231
    %v253 = vpop.f32.mrf.mxu0
    %v254 = vadd.f32 0.0, %v253
    %255 = vdwg.mxu0
    %v257 = vsel %vm229, %v146, 0
    %v260 = vsel %vm229, %v186, 0
    %262 = vmatpush.xpose.msra.mxu0 0.0
    %263 = vmatpush.xpose.msra.mxu0 0.0
    %264 = vmatpush.xpose.msra.mxu0 0.0
    %265 = vmatpush.xpose.msra.mxu0 0.0
    %266 = vmatpush.xpose.msra.mxu0 0.0
    %267 = vmatpush.xpose.msra.mxu0 0.0
    %268 = vmatpush.xpose.msra.mxu0 0.0
    %269 = vmatpush.xpose.msra.mxu0 0.0
    %270 = vmatpush.xpose.msra.mxu0 0.0
    %271 = vmatpush.xpose.msra.mxu0 0.0
    %272 = vmatpush.xpose.msra.mxu0 0.0
    %273 = vmatpush.xpose.msra.mxu0 0.0
    %274 = vmatpush.xpose.msra.mxu0 0.0
    %275 = vmatpush.xpose.msra.mxu0 0.0
    %276 = vmatpush.xpose.msra.mxu0 0.0
    %277 = vmatpush.xpose.msra.mxu0 %v260
    %278 = vmatmul.f32.gmra.mxu0 %v257
    %v279 = vpop.f32.mrf.mxu0
    %v280 = vadd.f32 0.0, %v279
    %281 = vdwg.mxu0
    %v282 = vsel %vm229, %v254, -inf
    %283 = vmax.xlane.f32.xlu0 %v282
    %v284 = vpop.xlane.xlu0 %283
    %v285 = vsel %vm229, %v280, -inf
    %286 = vmax.xlane.f32.xlu0 %v285
    %v287 = vpop.xlane.xlu0 %286
    %v288 = vsub.f32 %v254, %v284
    %v289 = vsub.f32 %v280, %v287
    %v290 = vmul.f32 %v288, 1.442695
    %v291 = vpow.pop %v290
    %v292 = vmul.f32 %v289, 1.442695
    %v293 = vpow.pop %v292
    %v294 = vsel %vm229, %v291, 0.0
    %295 = vadd.xlane.f32.xlu0 %v294
    %v296 = vpop.xlane.xlu0 %295
    %v297 = vsel %vm229, %v293, 0.0
    %298 = vadd.xlane.f32.xlu0 %v297
    %v299 = vpop.xlane.xlu0 %298
    %v300 = vrcp.pop %v296
    %v301 = vmul.f32 %v296, %v300
    %v302 = vsub.f32 1.0, %v301
    %v303 = vmul.f32 %v300, %v302
    %v304 = vadd.f32 %v300, %v303
    %vm305 = vweird.f32 %v296
    %vm306 = vweird.f32 %v300
    %vm307 = vmor %vm305, %vm306
    %v308 = vsel %vm307, %v300, %v304
    %v309 = vand.u32 2147483647, %v296
    %vm310 = vcmp.eq.f32.partialorder %v309, 8.507059e+37
    %v311 = vand.u32 %v296, 2147483648
    %v312 = vor.u32 1.1754944e-38, %v311
    %v313 = vsel %vm310, %v312, %v308
    %v314 = vrcp.pop %v299
    %v315 = vmul.f32 %v299, %v314
    %v316 = vsub.f32 1.0, %v315
    %v317 = vmul.f32 %v314, %v316
    %v318 = vadd.f32 %v314, %v317
    %vm319 = vweird.f32 %v299
    %vm320 = vweird.f32 %v314
    %vm321 = vmor %vm319, %vm320
    %v322 = vsel %vm321, %v314, %v318
    %v323 = vand.u32 2147483647, %v299
    %vm324 = vcmp.eq.f32.partialorder %v323, 8.507059e+37
    %v325 = vand.u32 %v299, 2147483648
    %v326 = vor.u32 1.1754944e-38, %v325
    %v327 = vsel %vm324, %v326, %v322
    %v328 = vmul.f32 %v291, %v313
    %v329 = vmul.f32 %v293, %v327
    %v331 = vsel %vm229, %v328, 0
    %333 = vmatpush.msra.mxu0 0.0
    %334 = vmatpush.msra.mxu0 0.0
    %335 = vmatpush.msra.mxu0 0.0
    %336 = vmatpush.msra.mxu0 0.0
    %337 = vmatpush.msra.mxu0 0.0
    %338 = vmatpush.msra.mxu0 0.0
    %339 = vmatpush.msra.mxu0 0.0
    %340 = vmatpush.msra.mxu0 0.0
    %341 = vmatpush.msra.mxu0 0.0
    %342 = vmatpush.msra.mxu0 0.0
    %343 = vmatpush.msra.mxu0 0.0
    %344 = vmatpush.msra.mxu0 0.0
    %345 = vmatpush.msra.mxu0 0.0
    %346 = vmatpush.msra.mxu0 0.0
    %347 = vmatpush.msra.mxu0 0.0
    %348 = vmatpush.msra.mxu0 %v224
    %349 = vmatmul.f32.gmra.mxu0 %v331
    %v350 = vpop.f32.mrf.mxu0
    %v351 = vadd.f32 0.0, %v350
    %352 = vdwg.mxu0
    %v354 = vsel %vm229, %v329, 0
    %356 = vmatpush.msra.mxu0 0.0
    %357 = vmatpush.msra.mxu0 0.0
    %358 = vmatpush.msra.mxu0 0.0
    %359 = vmatpush.msra.mxu0 0.0
    %360 = vmatpush.msra.mxu0 0.0
    %361 = vmatpush.msra.mxu0 0.0
    %362 = vmatpush.msra.mxu0 0.0
    %363 = vmatpush.msra.mxu0 0.0
    %364 = vmatpush.msra.mxu0 0.0
    %365 = vmatpush.msra.mxu0 0.0
    %366 = vmatpush.msra.mxu0 0.0
    %367 = vmatpush.msra.mxu0 0.0
    %368 = vmatpush.msra.mxu0 0.0
    %369 = vmatpush.msra.mxu0 0.0
    %370 = vmatpush.msra.mxu0 0.0
    %371 = vmatpush.msra.mxu0 %v227
    %372 = vmatmul.f32.gmra.mxu0 %v354
    %v373 = vpop.f32.mrf.mxu0
    %v374 = vadd.f32 0.0, %v373
    %375 = vdwg.mxu0
    %376 = vst.msk [vmem:[#allocation2] sm:$0xff] %vm229, %v351
    %377 = vst.msk [vmem:[#allocation2 + $0x8] sm:$0xff] %vm229, %v374
    %378 = vrot.lane.b32.xlu0 %v145, 120
    %v379 = vpop.permute.xlu0 %378
    %380 = vrot.lane.b32.xlu0 %v183, 120
    %v381 = vpop.permute.xlu0 %380
    %v382 = vsel %vm229, %v379, 0
    %v384 = vsel %vm229, %v381, 0
    %386 = vmatpush.xpose.msra.mxu0 0.0
    %387 = vmatpush.xpose.msra.mxu0 0.0
    %388 = vmatpush.xpose.msra.mxu0 0.0
    %389 = vmatpush.xpose.msra.mxu0 0.0
    %390 = vmatpush.xpose.msra.mxu0 0.0
    %391 = vmatpush.xpose.msra.mxu0 0.0
    %392 = vmatpush.xpose.msra.mxu0 0.0
    %393 = vmatpush.xpose.msra.mxu0 0.0
    %394 = vmatpush.xpose.msra.mxu0 0.0
    %395 = vmatpush.xpose.msra.mxu0 0.0
    %396 = vmatpush.xpose.msra.mxu0 0.0
    %397 = vmatpush.xpose.msra.mxu0 0.0
    %398 = vmatpush.xpose.msra.mxu0 0.0
    %399 = vmatpush.xpose.msra.mxu0 0.0
    %400 = vmatpush.xpose.msra.mxu0 0.0
    %401 = vmatpush.xpose.msra.mxu0 %v384
    %402 = vmatmul.f32.gmra.mxu0 %v382
    %v403 = vpop.f32.mrf.mxu0
    %v404 = vadd.f32 0.0, %v403
    %405 = vdwg.mxu0
    %406 = vrot.lane.b32.xlu0 %v146, 120
    %v407 = vpop.permute.xlu0 %406
    %408 = vrot.lane.b32.xlu0 %v186, 120
    %v409 = vpop.permute.xlu0 %408
    %v410 = vsel %vm229, %v407, 0
    %v412 = vsel %vm229, %v409, 0
    %414 = vmatpush.xpose.msra.mxu0 0.0
    %415 = vmatpush.xpose.msra.mxu0 0.0
    %416 = vmatpush.xpose.msra.mxu0 0.0
    %417 = vmatpush.xpose.msra.mxu0 0.0
    %418 = vmatpush.xpose.msra.mxu0 0.0
    %419 = vmatpush.xpose.msra.mxu0 0.0
    %420 = vmatpush.xpose.msra.mxu0 0.0
    %421 = vmatpush.xpose.msra.mxu0 0.0
    %422 = vmatpush.xpose.msra.mxu0 0.0
    %423 = vmatpush.xpose.msra.mxu0 0.0
    %424 = vmatpush.xpose.msra.mxu0 0.0
    %425 = vmatpush.xpose.msra.mxu0 0.0
    %426 = vmatpush.xpose.msra.mxu0 0.0
    %427 = vmatpush.xpose.msra.mxu0 0.0
    %428 = vmatpush.xpose.msra.mxu0 0.0
    %429 = vmatpush.xpose.msra.mxu0 %v412
    %430 = vmatmul.f32.gmra.mxu0 %v410
    %v431 = vpop.f32.mrf.mxu0
    %v432 = vadd.f32 0.0, %v431
    %433 = vdwg.mxu0
    %v434 = vsel %vm229, %v404, -inf
    %435 = vmax.xlane.f32.xlu0 %v434
    %v436 = vpop.xlane.xlu0 %435
    %v437 = vsel %vm229, %v432, -inf
    %438 = vmax.xlane.f32.xlu0 %v437
    %v439 = vpop.xlane.xlu0 %438
    %v440 = vsub.f32 %v404, %v436
    %v441 = vsub.f32 %v432, %v439
    %v442 = vmul.f32 %v440, 1.442695
    %v443 = vpow.pop %v442
    %v444 = vmul.f32 %v441, 1.442695
    %v445 = vpow.pop %v444
    %v446 = vsel %vm229, %v443, 0.0
    %447 = vadd.xlane.f32.xlu0 %v446
    %v448 = vpop.xlane.xlu0 %447
    %v449 = vsel %vm229, %v445, 0.0
    %450 = vadd.xlane.f32.xlu0 %v449
    %v451 = vpop.xlane.xlu0 %450
    %v452 = vrcp.pop %v448
    %v453 = vmul.f32 %v448, %v452
    %v454 = vsub.f32 1.0, %v453
    %v455 = vmul.f32 %v452, %v454
    %v456 = vadd.f32 %v452, %v455
    %vm457 = vweird.f32 %v448
    %vm458 = vweird.f32 %v452
    %vm459 = vmor %vm457, %vm458
    %v460 = vsel %vm459, %v452, %v456
    %v461 = vand.u32 2147483647, %v448
    %vm462 = vcmp.eq.f32.partialorder %v461, 8.507059e+37
    %v463 = vand.u32 %v448, 2147483648
    %v464 = vor.u32 1.1754944e-38, %v463
    %v465 = vsel %vm462, %v464, %v460
    %v466 = vrcp.pop %v451
    %v467 = vmul.f32 %v451, %v466
    %v468 = vsub.f32 1.0, %v467
    %v469 = vmul.f32 %v466, %v468
    %v470 = vadd.f32 %v466, %v469
    %vm471 = vweird.f32 %v451
    %vm472 = vweird.f32 %v466
    %vm473 = vmor %vm471, %vm472
    %v474 = vsel %vm473, %v466, %v470
    %v475 = vand.u32 2147483647, %v451
    %vm476 = vcmp.eq.f32.partialorder %v475, 8.507059e+37
    %v477 = vand.u32 %v451, 2147483648
    %v478 = vor.u32 1.1754944e-38, %v477
    %v479 = vsel %vm476, %v478, %v474
    %v480 = vmul.f32 %v443, %v465
    %v481 = vmul.f32 %v445, %v479
    %483 = vrot.lane.b32.xlu0 %v224, 120
    %v484 = vpop.permute.xlu0 %483
    %v487 = vsel %vm229, %v480, 0
    %489 = vmatpush.msra.mxu0 0.0
    %490 = vmatpush.msra.mxu0 0.0
    %491 = vmatpush.msra.mxu0 0.0
    %492 = vmatpush.msra.mxu0 0.0
    %493 = vmatpush.msra.mxu0 0.0
    %494 = vmatpush.msra.mxu0 0.0
    %495 = vmatpush.msra.mxu0 0.0
    %496 = vmatpush.msra.mxu0 0.0
    %497 = vmatpush.msra.mxu0 0.0
    %498 = vmatpush.msra.mxu0 0.0
    %499 = vmatpush.msra.mxu0 0.0
    %500 = vmatpush.msra.mxu0 0.0
    %501 = vmatpush.msra.mxu0 0.0
    %502 = vmatpush.msra.mxu0 0.0
    %503 = vmatpush.msra.mxu0 0.0
    %504 = vmatpush.msra.mxu0 %v484
    %505 = vmatmul.f32.gmra.mxu0 %v487
    %v506 = vpop.f32.mrf.mxu0
    %v507 = vadd.f32 0.0, %v506
    %508 = vdwg.mxu0
    %510 = vrot.lane.b32.xlu0 %v227, 120
    %v511 = vpop.permute.xlu0 %510
    %v514 = vsel %vm229, %v481, 0
    %516 = vmatpush.msra.mxu0 0.0
    %517 = vmatpush.msra.mxu0 0.0
    %518 = vmatpush.msra.mxu0 0.0
    %519 = vmatpush.msra.mxu0 0.0
    %520 = vmatpush.msra.mxu0 0.0
    %521 = vmatpush.msra.mxu0 0.0
    %522 = vmatpush.msra.mxu0 0.0
    %523 = vmatpush.msra.mxu0 0.0
    %524 = vmatpush.msra.mxu0 0.0
    %525 = vmatpush.msra.mxu0 0.0
    %526 = vmatpush.msra.mxu0 0.0
    %527 = vmatpush.msra.mxu0 0.0
    %528 = vmatpush.msra.mxu0 0.0
    %529 = vmatpush.msra.mxu0 0.0
    %530 = vmatpush.msra.mxu0 0.0
    %531 = vmatpush.msra.mxu0 %v511
    %532 = vmatmul.f32.gmra.mxu0 %v514
    %v533 = vpop.f32.mrf.mxu0
    %v534 = vadd.f32 0.0, %v533
    %535 = vdwg.mxu0
    %538 = vrot.lane.b32.xlu0 %v507, 8
    %v539 = vpop.permute.xlu0 %538
    %540 = vrot.lane.b32.xlu0 %v534, 8
    %v541 = vpop.permute.xlu0 %540
    %vm544 = vcmask 130112
    %545 = vst.msk [vmem:[#allocation2] sm:$0xff] %vm544, %v539
    %546 = vst.msk [vmem:[#allocation2 + $0x8] sm:$0xff] %vm544, %v541
    %547 = vrot.lane.b32.xlu0 %v145, 112
    %v548 = vpop.permute.xlu0 %547
    %549 = vrot.lane.b32.xlu0 %v183, 112
    %v550 = vpop.permute.xlu0 %549
    %v551 = vsel %vm229, %v548, 0
    %v553 = vsel %vm229, %v550, 0
    %555 = vmatpush.xpose.msra.mxu0 0.0
    %556 = vmatpush.xpose.msra.mxu0 0.0
    %557 = vmatpush.xpose.msra.mxu0 0.0
    %558 = vmatpush.xpose.msra.mxu0 0.0
    %559 = vmatpush.xpose.msra.mxu0 0.0
    %560 = vmatpush.xpose.msra.mxu0 0.0
    %561 = vmatpush.xpose.msra.mxu0 0.0
    %562 = vmatpush.xpose.msra.mxu0 0.0
    %563 = vmatpush.xpose.msra.mxu0 0.0
    %564 = vmatpush.xpose.msra.mxu0 0.0
    %565 = vmatpush.xpose.msra.mxu0 0.0
    %566 = vmatpush.xpose.msra.mxu0 0.0
    %567 = vmatpush.xpose.msra.mxu0 0.0
    %568 = vmatpush.xpose.msra.mxu0 0.0
    %569 = vmatpush.xpose.msra.mxu0 0.0
    %570 = vmatpush.xpose.msra.mxu0 %v553
    %571 = vmatmul.f32.gmra.mxu0 %v551
    %v572 = vpop.f32.mrf.mxu0
    %v573 = vadd.f32 0.0, %v572
    %574 = vdwg.mxu0
    %575 = vrot.lane.b32.xlu0 %v146, 112
    %v576 = vpop.permute.xlu0 %575
    %577 = vrot.lane.b32.xlu0 %v186, 112
    %v578 = vpop.permute.xlu0 %577
    %v579 = vsel %vm229, %v576, 0
    %v581 = vsel %vm229, %v578, 0
    %583 = vmatpush.xpose.msra.mxu0 0.0
    %584 = vmatpush.xpose.msra.mxu0 0.0
    %585 = vmatpush.xpose.msra.mxu0 0.0
    %586 = vmatpush.xpose.msra.mxu0 0.0
    %587 = vmatpush.xpose.msra.mxu0 0.0
    %588 = vmatpush.xpose.msra.mxu0 0.0
    %589 = vmatpush.xpose.msra.mxu0 0.0
    %590 = vmatpush.xpose.msra.mxu0 0.0
    %591 = vmatpush.xpose.msra.mxu0 0.0
    %592 = vmatpush.xpose.msra.mxu0 0.0
    %593 = vmatpush.xpose.msra.mxu0 0.0
    %594 = vmatpush.xpose.msra.mxu0 0.0
    %595 = vmatpush.xpose.msra.mxu0 0.0
    %596 = vmatpush.xpose.msra.mxu0 0.0
    %597 = vmatpush.xpose.msra.mxu0 0.0
    %598 = vmatpush.xpose.msra.mxu0 %v581
    %599 = vmatmul.f32.gmra.mxu0 %v579
    %v600 = vpop.f32.mrf.mxu0
    %v601 = vadd.f32 0.0, %v600
    %602 = vdwg.mxu0
    %v603 = vsel %vm229, %v573, -inf
    %604 = vmax.xlane.f32.xlu0 %v603
    %v605 = vpop.xlane.xlu0 %604
    %v606 = vsel %vm229, %v601, -inf
    %607 = vmax.xlane.f32.xlu0 %v606
    %v608 = vpop.xlane.xlu0 %607
    %v609 = vsub.f32 %v573, %v605
    %v610 = vsub.f32 %v601, %v608
    %v611 = vmul.f32 %v609, 1.442695
    %v612 = vpow.pop %v611
    %v613 = vmul.f32 %v610, 1.442695
    %v614 = vpow.pop %v613
    %v615 = vsel %vm229, %v612, 0.0
    %616 = vadd.xlane.f32.xlu0 %v615
    %v617 = vpop.xlane.xlu0 %616
    %v618 = vsel %vm229, %v614, 0.0
    %619 = vadd.xlane.f32.xlu0 %v618
    %v620 = vpop.xlane.xlu0 %619
    %v621 = vrcp.pop %v617
    %v622 = vmul.f32 %v617, %v621
    %v623 = vsub.f32 1.0, %v622
    %v624 = vmul.f32 %v621, %v623
    %v625 = vadd.f32 %v621, %v624
    %vm626 = vweird.f32 %v617
    %vm627 = vweird.f32 %v621
    %vm628 = vmor %vm626, %vm627
    %v629 = vsel %vm628, %v621, %v625
    %v630 = vand.u32 2147483647, %v617
    %vm631 = vcmp.eq.f32.partialorder %v630, 8.507059e+37
    %v632 = vand.u32 %v617, 2147483648
    %v633 = vor.u32 1.1754944e-38, %v632
    %v634 = vsel %vm631, %v633, %v629
    %v635 = vrcp.pop %v620
    %v636 = vmul.f32 %v620, %v635
    %v637 = vsub.f32 1.0, %v636
    %v638 = vmul.f32 %v635, %v637
    %v639 = vadd.f32 %v635, %v638
    %vm640 = vweird.f32 %v620
    %vm641 = vweird.f32 %v635
    %vm642 = vmor %vm640, %vm641
    %v643 = vsel %vm642, %v635, %v639
    %v644 = vand.u32 2147483647, %v620
    %vm645 = vcmp.eq.f32.partialorder %v644, 8.507059e+37
    %v646 = vand.u32 %v620, 2147483648
    %v647 = vor.u32 1.1754944e-38, %v646
    %v648 = vsel %vm645, %v647, %v643
    %v649 = vmul.f32 %v612, %v634
    %v650 = vmul.f32 %v614, %v648
    %651 = vrot.lane.b32.xlu0 %v224, 112
    %v652 = vpop.permute.xlu0 %651
    %v655 = vsel %vm229, %v649, 0
    %657 = vmatpush.msra.mxu0 0.0
    %658 = vmatpush.msra.mxu0 0.0
    %659 = vmatpush.msra.mxu0 0.0
    %660 = vmatpush.msra.mxu0 0.0
    %661 = vmatpush.msra.mxu0 0.0
    %662 = vmatpush.msra.mxu0 0.0
    %663 = vmatpush.msra.mxu0 0.0
    %664 = vmatpush.msra.mxu0 0.0
    %665 = vmatpush.msra.mxu0 0.0
    %666 = vmatpush.msra.mxu0 0.0
    %667 = vmatpush.msra.mxu0 0.0
    %668 = vmatpush.msra.mxu0 0.0
    %669 = vmatpush.msra.mxu0 0.0
    %670 = vmatpush.msra.mxu0 0.0
    %671 = vmatpush.msra.mxu0 0.0
    %672 = vmatpush.msra.mxu0 %v652
    %673 = vmatmul.f32.gmra.mxu0 %v655
    %v674 = vpop.f32.mrf.mxu0
    %v675 = vadd.f32 0.0, %v674
    %676 = vdwg.mxu0
    %677 = vrot.lane.b32.xlu0 %v227, 112
    %v678 = vpop.permute.xlu0 %677
    %v681 = vsel %vm229, %v650, 0
    %683 = vmatpush.msra.mxu0 0.0
    %684 = vmatpush.msra.mxu0 0.0
    %685 = vmatpush.msra.mxu0 0.0
    %686 = vmatpush.msra.mxu0 0.0
    %687 = vmatpush.msra.mxu0 0.0
    %688 = vmatpush.msra.mxu0 0.0
    %689 = vmatpush.msra.mxu0 0.0
    %690 = vmatpush.msra.mxu0 0.0
    %691 = vmatpush.msra.mxu0 0.0
    %692 = vmatpush.msra.mxu0 0.0
    %693 = vmatpush.msra.mxu0 0.0
    %694 = vmatpush.msra.mxu0 0.0
    %695 = vmatpush.msra.mxu0 0.0
    %696 = vmatpush.msra.mxu0 0.0
    %697 = vmatpush.msra.mxu0 0.0
    %698 = vmatpush.msra.mxu0 %v678
    %699 = vmatmul.f32.gmra.mxu0 %v681
    %v700 = vpop.f32.mrf.mxu0
    %v701 = vadd.f32 0.0, %v700
    %702 = vdwg.mxu0
    %705 = vrot.lane.b32.xlu0 %v675, 16
    %v706 = vpop.permute.xlu0 %705
    %707 = vrot.lane.b32.xlu0 %v701, 16
    %v708 = vpop.permute.xlu0 %707
    %vm711 = vcmask 195712
    %712 = vst.msk [vmem:[#allocation2] sm:$0xff] %vm711, %v706
    %713 = vst.msk [vmem:[#allocation2 + $0x8] sm:$0xff] %vm711, %v708
    %714 = vrot.lane.b32.xlu0 %v145, 104
    %v715 = vpop.permute.xlu0 %714
    %716 = vrot.lane.b32.xlu0 %v183, 104
    %v717 = vpop.permute.xlu0 %716
    %v718 = vsel %vm229, %v715, 0
    %v720 = vsel %vm229, %v717, 0
    %722 = vmatpush.xpose.msra.mxu0 0.0
    %723 = vmatpush.xpose.msra.mxu0 0.0
    %724 = vmatpush.xpose.msra.mxu0 0.0
    %725 = vmatpush.xpose.msra.mxu0 0.0
    %726 = vmatpush.xpose.msra.mxu0 0.0
    %727 = vmatpush.xpose.msra.mxu0 0.0
    %728 = vmatpush.xpose.msra.mxu0 0.0
    %729 = vmatpush.xpose.msra.mxu0 0.0
    %730 = vmatpush.xpose.msra.mxu0 0.0
    %731 = vmatpush.xpose.msra.mxu0 0.0
    %732 = vmatpush.xpose.msra.mxu0 0.0
    %733 = vmatpush.xpose.msra.mxu0 0.0
    %734 = vmatpush.xpose.msra.mxu0 0.0
    %735 = vmatpush.xpose.msra.mxu0 0.0
    %736 = vmatpush.xpose.msra.mxu0 0.0
    %737 = vmatpush.xpose.msra.mxu0 %v720
    %738 = vmatmul.f32.gmra.mxu0 %v718
    %v739 = vpop.f32.mrf.mxu0
    %v740 = vadd.f32 0.0, %v739
    %741 = vdwg.mxu0
    %742 = vrot.lane.b32.xlu0 %v146, 104
    %v743 = vpop.permute.xlu0 %742
    %744 = vrot.lane.b32.xlu0 %v186, 104
    %v745 = vpop.permute.xlu0 %744
    %v746 = vsel %vm229, %v743, 0
    %v748 = vsel %vm229, %v745, 0
    %750 = vmatpush.xpose.msra.mxu0 0.0
    %751 = vmatpush.xpose.msra.mxu0 0.0
    %752 = vmatpush.xpose.msra.mxu0 0.0
    %753 = vmatpush.xpose.msra.mxu0 0.0
    %754 = vmatpush.xpose.msra.mxu0 0.0
    %755 = vmatpush.xpose.msra.mxu0 0.0
    %756 = vmatpush.xpose.msra.mxu0 0.0
    %757 = vmatpush.xpose.msra.mxu0 0.0
    %758 = vmatpush.xpose.msra.mxu0 0.0
    %759 = vmatpush.xpose.msra.mxu0 0.0
    %760 = vmatpush.xpose.msra.mxu0 0.0
    %761 = vmatpush.xpose.msra.mxu0 0.0
    %762 = vmatpush.xpose.msra.mxu0 0.0
    %763 = vmatpush.xpose.msra.mxu0 0.0
    %764 = vmatpush.xpose.msra.mxu0 0.0
    %765 = vmatpush.xpose.msra.mxu0 %v748
    %766 = vmatmul.f32.gmra.mxu0 %v746
    %v767 = vpop.f32.mrf.mxu0
    %v768 = vadd.f32 0.0, %v767
    %769 = vdwg.mxu0
    %v770 = vsel %vm229, %v740, -inf
    %771 = vmax.xlane.f32.xlu0 %v770
    %v772 = vpop.xlane.xlu0 %771
    %v773 = vsel %vm229, %v768, -inf
    %774 = vmax.xlane.f32.xlu0 %v773
    %v775 = vpop.xlane.xlu0 %774
    %v776 = vsub.f32 %v740, %v772
    %v777 = vsub.f32 %v768, %v775
    %v778 = vmul.f32 %v776, 1.442695
    %v779 = vpow.pop %v778
    %v780 = vmul.f32 %v777, 1.442695
    %v781 = vpow.pop %v780
    %v782 = vsel %vm229, %v779, 0.0
    %783 = vadd.xlane.f32.xlu0 %v782
    %v784 = vpop.xlane.xlu0 %783
    %v785 = vsel %vm229, %v781, 0.0
    %786 = vadd.xlane.f32.xlu0 %v785
    %v787 = vpop.xlane.xlu0 %786
    %v788 = vrcp.pop %v784
    %v789 = vmul.f32 %v784, %v788
    %v790 = vsub.f32 1.0, %v789
    %v791 = vmul.f32 %v788, %v790
    %v792 = vadd.f32 %v788, %v791
    %vm793 = vweird.f32 %v784
    %vm794 = vweird.f32 %v788
    %vm795 = vmor %vm793, %vm794
    %v796 = vsel %vm795, %v788, %v792
    %v797 = vand.u32 2147483647, %v784
    %vm798 = vcmp.eq.f32.partialorder %v797, 8.507059e+37
    %v799 = vand.u32 %v784, 2147483648
    %v800 = vor.u32 1.1754944e-38, %v799
    %v801 = vsel %vm798, %v800, %v796
    %v802 = vrcp.pop %v787
    %v803 = vmul.f32 %v787, %v802
    %v804 = vsub.f32 1.0, %v803
    %v805 = vmul.f32 %v802, %v804
    %v806 = vadd.f32 %v802, %v805
    %vm807 = vweird.f32 %v787
    %vm808 = vweird.f32 %v802
    %vm809 = vmor %vm807, %vm808
    %v810 = vsel %vm809, %v802, %v806
    %v811 = vand.u32 2147483647, %v787
    %vm812 = vcmp.eq.f32.partialorder %v811, 8.507059e+37
    %v813 = vand.u32 %v787, 2147483648
    %v814 = vor.u32 1.1754944e-38, %v813
    %v815 = vsel %vm812, %v814, %v810
    %v816 = vmul.f32 %v779, %v801
    %v817 = vmul.f32 %v781, %v815
    %818 = vrot.lane.b32.xlu0 %v224, 104
    %v819 = vpop.permute.xlu0 %818
    %v822 = vsel %vm229, %v816, 0
    %824 = vmatpush.msra.mxu0 0.0
    %825 = vmatpush.msra.mxu0 0.0
    %826 = vmatpush.msra.mxu0 0.0
    %827 = vmatpush.msra.mxu0 0.0
    %828 = vmatpush.msra.mxu0 0.0
    %829 = vmatpush.msra.mxu0 0.0
    %830 = vmatpush.msra.mxu0 0.0
    %831 = vmatpush.msra.mxu0 0.0
    %832 = vmatpush.msra.mxu0 0.0
    %833 = vmatpush.msra.mxu0 0.0
    %834 = vmatpush.msra.mxu0 0.0
    %835 = vmatpush.msra.mxu0 0.0
    %836 = vmatpush.msra.mxu0 0.0
    %837 = vmatpush.msra.mxu0 0.0
    %838 = vmatpush.msra.mxu0 0.0
    %839 = vmatpush.msra.mxu0 %v819
    %840 = vmatmul.f32.gmra.mxu0 %v822
    %v841 = vpop.f32.mrf.mxu0
    %v842 = vadd.f32 0.0, %v841
    %843 = vdwg.mxu0
    %844 = vrot.lane.b32.xlu0 %v227, 104
    %v845 = vpop.permute.xlu0 %844
    %v848 = vsel %vm229, %v817, 0
    %850 = vmatpush.msra.mxu0 0.0
    %851 = vmatpush.msra.mxu0 0.0
    %852 = vmatpush.msra.mxu0 0.0
    %853 = vmatpush.msra.mxu0 0.0
    %854 = vmatpush.msra.mxu0 0.0
    %855 = vmatpush.msra.mxu0 0.0
    %856 = vmatpush.msra.mxu0 0.0
    %857 = vmatpush.msra.mxu0 0.0
    %858 = vmatpush.msra.mxu0 0.0
    %859 = vmatpush.msra.mxu0 0.0
    %860 = vmatpush.msra.mxu0 0.0
    %861 = vmatpush.msra.mxu0 0.0
    %862 = vmatpush.msra.mxu0 0.0
    %863 = vmatpush.msra.mxu0 0.0
    %864 = vmatpush.msra.mxu0 0.0
    %865 = vmatpush.msra.mxu0 %v845
    %866 = vmatmul.f32.gmra.mxu0 %v848
    %v867 = vpop.f32.mrf.mxu0
    %v868 = vadd.f32 0.0, %v867
    %869 = vdwg.mxu0
    %872 = vrot.lane.b32.xlu0 %v842, 24
    %v873 = vpop.permute.xlu0 %872
    %874 = vrot.lane.b32.xlu0 %v868, 24
    %v875 = vpop.permute.xlu0 %874
    %vm878 = vcmask 261312
    %879 = vst.msk [vmem:[#allocation2] sm:$0xff] %vm878, %v873
    %880 = vst.msk [vmem:[#allocation2 + $0x8] sm:$0xff] %vm878, %v875
    %v881 = vld [vmem:[#allocation2] sm:$0xff]
    %v882 = vld [vmem:[#allocation2 + $0x8] sm:$0xff]
    %v883 = vld [vmem:[#allocation11] sm:$0xff]
    %v884 = vld [vmem:[#allocation11 + $0x8] sm:$0xff]
    %v885 = vld [vmem:[#allocation11 + $0x10] sm:$0xff]
    %v886 = vld [vmem:[#allocation11 + $0x18] sm:$0xff]
    %v887 = vld [vmem:[%s6] sm:$0x1]
    %v889 = vperm.slane %v887, 0
    %v892 = vsel %vm115, %v881, 0
    %v895 = vsel %vm115, %v882, 0
    %897 = vmatpush.msra.mxu0 0.0
    %898 = vmatpush.msra.mxu0 0.0
    %899 = vmatpush.msra.mxu0 0.0
    %900 = vmatpush.msra.mxu0 0.0
    %901 = vmatpush.msra.mxu0 0.0
    %902 = vmatpush.msra.mxu0 0.0
    %903 = vmatpush.msra.mxu0 0.0
    %904 = vmatpush.msra.mxu0 0.0
    %905 = vmatpush.msra.mxu0 0.0
    %906 = vmatpush.msra.mxu0 0.0
    %907 = vmatpush.msra.mxu0 0.0
    %908 = vmatpush.msra.mxu0 0.0
    %909 = vmatpush.msra.mxu0 %v886
    %910 = vmatpush.msra.mxu0 %v885
    %911 = vmatpush.msra.mxu0 %v884
    %912 = vmatpush.msra.mxu0 %v883
    %913 = vmatmul.f32.gmra.mxu0 %v892
    %v914 = vpop.f32.mrf.mxu0
    %v915 = vadd.f32 %v889, %v914
    %916 = vmatmul.f32.gmra.mxu0 %v895
    %v917 = vpop.f32.mrf.mxu0
    %v918 = vadd.f32 %v889, %v917
    %919 = vdwg.mxu0
    %920 = vst.msk [vmem:[#allocation12] sm:$0xff] %vm115, %v915
    %921 = vst.msk [vmem:[#allocation12 + $0x8] sm:$0xff] %vm115, %v918
    // Predicated region
    $region50: #{tpu_custom_call.1} parent=1 // pred_check
      _
    $region51: #{tpu_custom_call.1} parent=1 // pred_check_branch
      %923 = sbr.rel (0) target = $region53
    $region52: #{tpu_custom_call.1} parent=1 // pred_region
      %925 = vsyncadd [#allocation5], 0
      %s926 = sshll.u32 [#allocation12], 4
      %s927 = int_to_ptr.vmem [resolvable:$true] %s926
      %s928 = sshll.u32 %s7, 4
      %s929 = int_to_ptr.hbm [resolvable:$true] %s928
      %934 = dma.vmem_to_hbm [thread:$0]  %s927, 256, %s929, [#allocation5], 128, 128, 8
    $region53: #{tpu_custom_call.1} parent=1 // pred_fallthru
      _
    // Predicated region
    $region54: #{tpu_custom_call.1} parent=1 // pred_check
      _
    $region55: #{tpu_custom_call.1} parent=1 // pred_check_branch
      %936 = sbr.rel (0) target = $region57
    $region56: #{tpu_custom_call.1} parent=1 // pred_region
      %938 = dma.done [#allocation5], 256
    $region57: #{tpu_custom_call.1} parent=1 // pred_fallthru
      _
    %939 = vsyncpa [#allocation4], 1
    %940 = vsyncpa [#allocation7], 1
    %941 = vsyncpa [#allocation10], 1
    %942 = vsyncpa [#allocation5], 1

// kernel: tpu_custom_call.1
$region0: #{tpu_custom_call.1}
  #allocation0 [shape = 'u32[]', space=smem, size = 0x4, offset = 0x4, fixed_abs, tag = 'smem constant byte address 0x4 - core index']
  #allocation1 [shape = 'u32[72,128]{1,0:T(1,128)}', space=vmem, size = 0x9000, scoped, tag = 'internal scratch']
  #allocation2 [shape = 'f32[16,32]{1,0:T(8,128)}', space=vmem, size = 0x2000, scoped, tag = 'scratch operand']
  %s0 = inlined_call_operand.hbm [shape: f32[2,8,32], index: 0, kind: input, shape index: {}]
  %s1 = inlined_call_operand.hbm [shape: f32[2,8,32], index: 1, kind: input, shape index: {}]
  %s2 = inlined_call_operand.hbm [shape: f32[2,8,32], index: 2, kind: input, shape index: {}]
  %s3 = inlined_call_operand.hbm [shape: f32[3,32,32], index: 3, kind: input, shape index: {}]
  %s4 = inlined_call_operand.hbm [shape: f32[32,32], index: 4, kind: input, shape index: {}]
  %s5 = inlined_call_operand.vmem [shape: f32[3,1,32], index: 5, kind: input, shape index: {}]
  %s6 = inlined_call_operand.vmem [shape: f32[1,32], index: 6, kind: input, shape index: {}]
  %s7 = inlined_call_operand.hbm [shape: f32[2,8,32], index: 7, kind: output, shape index: {}]
  %s8 = sld [smem:[#allocation0]]
  $region58: #{tpu_custom_call.1} parent=0
    _
  %s10 = ssub.s32 1, %s8
  %s11 = scalar_select 0, %s10, %s8
  $region1: #{tpu_custom_call.1} parent=0
    #allocation3 [shape = 'u8[8192]{0}', space=vmem, size = 0x2000, scoped, tag = 'input window, operand 0, single buffered']
    #allocation4 [shape = 's32[1]{0}', space=sflag, size = 0x4, scoped, tag = 'scoped memory for tpu_custom_call.1']
    #allocation5 [shape = 's32[1]{0}', space=sflag, size = 0x4, scoped, tag = 'scoped memory for tpu_custom_call.1']
    #allocation6 [shape = 'u8[8192]{0}', space=vmem, size = 0x2000, scoped, tag = 'input window, operand 1, single buffered']
    #allocation7 [shape = 's32[1]{0}', space=sflag, size = 0x4, scoped, tag = 'scoped memory for tpu_custom_call.1']
    #allocation8 [shape = 'u8[8192]{0}', space=vmem, size = 0x2000, scoped, tag = 'input window, operand 2, single buffered']
    #allocation9 [shape = 'u8[49152]{0}', space=vmem, size = 0xc000, scoped, tag = 'input window, operand 3, single buffered']
    #allocation10 [shape = 's32[1]{0}', space=sflag, size = 0x4, scoped, tag = 'scoped memory for tpu_custom_call.1']
    #allocation11 [shape = 'u8[16384]{0}', space=vmem, size = 0x4000, scoped, tag = 'input window, operand 4, single buffered']
    #allocation12 [shape = 'u8[8192]{0}', space=vmem, size = 0x2000, scoped, tag = 'output window, operand 0, single buffered']
    %12 = vsyncpa [#allocation4], 0
    %13 = vsyncpa [#allocation7], 0
    %14 = vsyncpa [#allocation10], 0
    %15 = vsyncpa [#allocation5], 0
    // Predicated region
    $region2: #{tpu_custom_call.1} parent=1 // pred_check
      _
    $region3: #{tpu_custom_call.1} parent=1 // pred_check_branch
      %17 = sbr.rel (0) target = $region5
    $region4: #{tpu_custom_call.1} parent=1 // pred_region
      %19 = vsyncadd [#allocation4], 0
      %s20 = sshll.u32 %s0, 4
      %s21 = int_to_ptr.hbm [resolvable:$true] %s20
      %s22 = sshll.u32 [#allocation3], 4
      %s23 = int_to_ptr.vmem [resolvable:$true] %s22
      %28 = dma.hbm_to_vmem [thread:$0]  %s21, 256, %s23, [#allocation4], 128, 128, 8
    $region5: #{tpu_custom_call.1} parent=1 // pred_fallthru
      _
    // Predicated region
    $region6: #{tpu_custom_call.1} parent=1 // pred_check
      _
    $region7: #{tpu_custom_call.1} parent=1 // pred_check_branch
      %30 = sbr.rel (0) target = $region9
    $region8: #{tpu_custom_call.1} parent=1 // pred_region
      %32 = vsyncadd [#allocation7], 0
      %s33 = sshll.u32 %s1, 4
      %s34 = int_to_ptr.hbm [resolvable:$true] %s33
      %s35 = sshll.u32 [#allocation6], 4
      %s36 = int_to_ptr.vmem [resolvable:$true] %s35
      %41 = dma.hbm_to_vmem [thread:$0]  %s34, 256, %s36, [#allocation7], 128, 128, 8
    $region9: #{tpu_custom_call.1} parent=1 // pred_fallthru
      _
    // Predicated region
    $region10: #{tpu_custom_call.1} parent=1 // pred_check
      _
    $region11: #{tpu_custom_call.1} parent=1 // pred_check_branch
      %43 = sbr.rel (0) target = $region13
    $region12: #{tpu_custom_call.1} parent=1 // pred_region
      %45 = vsyncadd [#allocation7], 0
      %s46 = sshll.u32 %s2, 4
      %s47 = int_to_ptr.hbm [resolvable:$true] %s46
      %s48 = sshll.u32 [#allocation8], 4
      %s49 = int_to_ptr.vmem [resolvable:$true] %s48
      %54 = dma.hbm_to_vmem [thread:$0]  %s47, 256, %s49, [#allocation7], 128, 128, 8
    $region13: #{tpu_custom_call.1} parent=1 // pred_fallthru
      _
    // Predicated region
    $region14: #{tpu_custom_call.1} parent=1 // pred_check
      _
    $region15: #{tpu_custom_call.1} parent=1 // pred_check_branch
      %56 = sbr.rel (0) target = $region17
    $region16: #{tpu_custom_call.1} parent=1 // pred_region
      %58 = vsyncadd [#allocation10], 0
      %s59 = sshll.u32 %s3, 4
      %s60 = int_to_ptr.hbm [resolvable:$true] %s59
      %s61 = sshll.u32 [#allocation9], 4
      %s62 = int_to_ptr.vmem [resolvable:$true] %s61
      %67 = dma.hbm_to_vmem [thread:$0]  %s60, 1536, %s62, [#allocation10], 128, 128, 8
    $region17: #{tpu_custom_call.1} parent=1 // pred_fallthru
      _
    // Predicated region
    $region18: #{tpu_custom_call.1} parent=1 // pred_check
      _
    $region19: #{tpu_custom_call.1} parent=1 // pred_check_branch
      %69 = sbr.rel (0) target = $region21
    $region20: #{tpu_custom_call.1} parent=1 // pred_region
      %71 = vsyncadd [#allocation10], 0
      %s72 = sshll.u32 %s4, 4
      %s73 = int_to_ptr.hbm [resolvable:$true] %s72
      %s74 = sshll.u32 [#allocation11], 4
      %s75 = int_to_ptr.vmem [resolvable:$true] %s74
      %80 = dma.hbm_to_vmem [thread:$0]  %s73, 512, %s75, [#allocation10], 128, 128, 8
    $region21: #{tpu_custom_call.1} parent=1 // pred_fallthru
      _
    // Predicated region
    $region22: #{tpu_custom_call.1} parent=1 // pred_check
      _
    $region23: #{tpu_custom_call.1} parent=1 // pred_check_branch
      %82 = sbr.rel (0) target = $region25
    $region24: #{tpu_custom_call.1} parent=1 // pred_region
      _
    $region25: #{tpu_custom_call.1} parent=1 // pred_fallthru
      _
    // Predicated region
    $region26: #{tpu_custom_call.1} parent=1 // pred_check
      _
    $region27: #{tpu_custom_call.1} parent=1 // pred_check_branch
      %84 = sbr.rel (0) target = $region29
    $region28: #{tpu_custom_call.1} parent=1 // pred_region
      _
    $region29: #{tpu_custom_call.1} parent=1 // pred_fallthru
      _
    // Predicated region
    $region30: #{tpu_custom_call.1} parent=1 // pred_check
      _
    $region31: #{tpu_custom_call.1} parent=1 // pred_check_branch
      %86 = sbr.rel (0) target = $region33
    $region32: #{tpu_custom_call.1} parent=1 // pred_region
      %88 = dma.done [#allocation4], 256
    $region33: #{tpu_custom_call.1} parent=1 // pred_fallthru
      _
    // Predicated region
    $region34: #{tpu_custom_call.1} parent=1 // pred_check
      _
    $region35: #{tpu_custom_call.1} parent=1 // pred_check_branch
      %90 = sbr.rel (0) target = $region37
    $region36: #{tpu_custom_call.1} parent=1 // pred_region
      %92 = dma.done [#allocation7], 256
    $region37: #{tpu_custom_call.1} parent=1 // pred_fallthru
      _
    // Predicated region
    $region38: #{tpu_custom_call.1} parent=1 // pred_check
      _
    $region39: #{tpu_custom_call.1} parent=1 // pred_check_branch
      %94 = sbr.rel (0) target = $region41
    $region40: #{tpu_custom_call.1} parent=1 // pred_region
      %96 = dma.done [#allocation7], 256
    $region41: #{tpu_custom_call.1} parent=1 // pred_fallthru
      _
    // Predicated region
    $region42: #{tpu_custom_call.1} parent=1 // pred_check
      _
    $region43: #{tpu_custom_call.1} parent=1 // pred_check_branch
      %98 = sbr.rel (0) target = $region45
    $region44: #{tpu_custom_call.1} parent=1 // pred_region
      %100 = dma.done [#allocation10], 1536
    $region45: #{tpu_custom_call.1} parent=1 // pred_fallthru
      _
    // Predicated region
    $region46: #{tpu_custom_call.1} parent=1 // pred_check
      _
    $region47: #{tpu_custom_call.1} parent=1 // pred_check_branch
      %102 = sbr.rel (0) target = $region49
    $region48: #{tpu_custom_call.1} parent=1 // pred_region
      %104 = dma.done [#allocation10], 512
    $region49: #{tpu_custom_call.1} parent=1 // pred_fallthru
      _
    %v105 = vld [vmem:[#allocation3] sm:$0xff]
    %v106 = vld [vmem:[#allocation3 + $0x8] sm:$0xff]
    %v107 = vld [vmem:[#allocation9] sm:$0xff]
    %v108 = vld [vmem:[#allocation9 + $0x8] sm:$0xff]
    %v109 = vld [vmem:[#allocation9 + $0x10] sm:$0xff]
    %v110 = vld [vmem:[#allocation9 + $0x18] sm:$0xff]
    %v111 = vld [vmem:[%s5] sm:$0x1]
    %v113 = vperm.slane %v111, 0
    %vm115 = vcmask 261120
    %v117 = vsel %vm115, %v105, 0
    %v120 = vsel %vm115, %v106, 0
    %122 = vmatpush.msra.mxu0 0.0
    %123 = vmatpush.msra.mxu0 0.0
    %124 = vmatpush.msra.mxu0 0.0
    %125 = vmatpush.msra.mxu0 0.0
    %126 = vmatpush.msra.mxu0 0.0
    %127 = vmatpush.msra.mxu0 0.0
    %128 = vmatpush.msra.mxu0 0.0
    %129 = vmatpush.msra.mxu0 0.0
    %130 = vmatpush.msra.mxu0 0.0
    %131 = vmatpush.msra.mxu0 0.0
    %132 = vmatpush.msra.mxu0 0.0
    %133 = vmatpush.msra.mxu0 0.0
    %134 = vmatpush.msra.mxu0 %v110
    %135 = vmatpush.msra.mxu0 %v109
    %136 = vmatpush.msra.mxu0 %v108
    %137 = vmatpush.msra.mxu0 %v107
    %138 = vmatmul.f32.gmra.mxu0 %v117
    %v139 = vpop.f32.mrf.mxu0
    %v140 = vadd.f32 %v113, %v139
    %141 = vmatmul.f32.gmra.mxu0 %v120
    %v142 = vpop.f32.mrf.mxu0
    %v143 = vadd.f32 %v113, %v142
    %144 = vdwg.mxu0
    %v145 = vmul.f32 %v140, 0.35355338
    %v146 = vmul.f32 %v143, 0.35355338
    %v147 = vld [vmem:[#allocation6] sm:$0xff]
    %v148 = vld [vmem:[#allocation6 + $0x8] sm:$0xff]
    %s149 = scalar_lea.vmem [#allocation9], 32
    %v150 = vld [vmem:[%s149] sm:$0xff]
    %v151 = vld [vmem:[%s149 + $0x8] sm:$0xff]
    %v152 = vld [vmem:[%s149 + $0x10] sm:$0xff]
    %v153 = vld [vmem:[%s149 + $0x18] sm:$0xff]
    %s154 = scalar_lea.vmem %s5, 1
    %v155 = vld [vmem:[%s154] sm:$0x1]
    %v157 = vperm.slane %v155, 0
    %v160 = vsel %vm115, %v147, 0
    %v163 = vsel %vm115, %v148, 0
    %165 = vmatpush.msra.mxu0 0.0
    %166 = vmatpush.msra.mxu0 0.0
    %167 = vmatpush.msra.mxu0 0.0
    %168 = vmatpush.msra.mxu0 0.0
    %169 = vmatpush.msra.mxu0 0.0
    %170 = vmatpush.msra.mxu0 0.0
    %171 = vmatpush.msra.mxu0 0.0
    %172 = vmatpush.msra.mxu0 0.0
    %173 = vmatpush.msra.mxu0 0.0
    %174 = vmatpush.msra.mxu0 0.0
    %175 = vmatpush.msra.mxu0 0.0
    %176 = vmatpush.msra.mxu0 0.0
    %177 = vmatpush.msra.mxu0 %v153
    %178 = vmatpush.msra.mxu0 %v152
    %179 = vmatpush.msra.mxu0 %v151
    %180 = vmatpush.msra.mxu0 %v150
    %181 = vmatmul.f32.gmra.mxu0 %v160
    %v182 = vpop.f32.mrf.mxu0
    %v183 = vadd.f32 %v157, %v182
    %184 = vmatmul.f32.gmra.mxu0 %v163
    %v185 = vpop.f32.mrf.mxu0
    %v186 = vadd.f32 %v157, %v185
    %187 = vdwg.mxu0
    %v188 = vld [vmem:[#allocation8] sm:$0xff]
    %v189 = vld [vmem:[#allocation8 + $0x8] sm:$0xff]
    %s190 = scalar_lea.vmem [#allocation9], 64
    %v191 = vld [vmem:[%s190] sm:$0xff]
    %v192 = vld [vmem:[%s190 + $0x8] sm:$0xff]
    %v193 = vld [vmem:[%s190 + $0x10] sm:$0xff]
    %v194 = vld [vmem:[%s190 + $0x18] sm:$0xff]
    %s195 = scalar_lea.vmem %s5, 2
    %v196 = vld [vmem:[%s195] sm:$0x1]
    %v198 = vperm.slane %v196, 0
    %v201 = vsel %vm115, %v188, 0
    %v204 = vsel %vm115, %v189, 0
    %206 = vmatpush.msra.mxu0 0.0
    %207 = vmatpush.msra.mxu0 0.0
    %208 = vmatpush.msra.mxu0 0.0
    %209 = vmatpush.msra.mxu0 0.0
    %210 = vmatpush.msra.mxu0 0.0
    %211 = vmatpush.msra.mxu0 0.0
    %212 = vmatpush.msra.mxu0 0.0
    %213 = vmatpush.msra.mxu0 0.0
    %214 = vmatpush.msra.mxu0 0.0
    %215 = vmatpush.msra.mxu0 0.0
    %216 = vmatpush.msra.mxu0 0.0
    %217 = vmatpush.msra.mxu0 0.0
    %218 = vmatpush.msra.mxu0 %v194
    %219 = vmatpush.msra.mxu0 %v193
    %220 = vmatpush.msra.mxu0 %v192
    %221 = vmatpush.msra.mxu0 %v191
    %222 = vmatmul.f32.gmra.mxu0 %v201
    %v223 = vpop.f32.mrf.mxu0
    %v224 = vadd.f32 %v198, %v223
    %225 = vmatmul.f32.gmra.mxu0 %v204
    %v226 = vpop.f32.mrf.mxu0
    %v227 = vadd.f32 %v198, %v226
    %228 = vdwg.mxu0
    %vm229 = vcmask 64512
    %v231 = vsel %vm229, %v145, 0
    %v234 = vsel %vm229, %v183, 0
    %236 = vmatpush.xpose.msra.mxu0 0.0
    %237 = vmatpush.xpose.msra.mxu0 0.0
    %238 = vmatpush.xpose.msra.mxu0 0.0
    %239 = vmatpush.xpose.msra.mxu0 0.0
    %240 = vmatpush.xpose.msra.mxu0 0.0
    %241 = vmatpush.xpose.msra.mxu0 0.0
    %242 = vmatpush.xpose.msra.mxu0 0.0
    %243 = vmatpush.xpose.msra.mxu0 0.0
    %244 = vmatpush.xpose.msra.mxu0 0.0
    %245 = vmatpush.xpose.msra.mxu0 0.0
    %246 = vmatpush.xpose.msra.mxu0 0.0
    %247 = vmatpush.xpose.msra.mxu0 0.0
    %248 = vmatpush.xpose.msra.mxu0 0.0
    %249 = vmatpush.xpose.msra.mxu0 0.0
    %250 = vmatpush.xpose.msra.mxu0 0.0
    %251 = vmatpush.xpose.msra.mxu0 %v234
    %252 = vmatmul.f32.gmra.mxu0 %v231
    %v253 = vpop.f32.mrf.mxu0
    %v254 = vadd.f32 0.0, %v253
    %255 = vdwg.mxu0
    %v257 = vsel %vm229, %v146, 0
    %v260 = vsel %vm229, %v186, 0
    %262 = vmatpush.xpose.msra.mxu0 0.0
    %263 = vmatpush.xpose.msra.mxu0 0.0
    %264 = vmatpush.xpose.msra.mxu0 0.0
    %265 = vmatpush.xpose.msra.mxu0 0.0
    %266 = vmatpush.xpose.msra.mxu0 0.0
    %267 = vmatpush.xpose.msra.mxu0 0.0
    %268 = vmatpush.xpose.msra.mxu0 0.0
    %269 = vmatpush.xpose.msra.mxu0 0.0
    %270 = vmatpush.xpose.msra.mxu0 0.0
    %271 = vmatpush.xpose.msra.mxu0 0.0
    %272 = vmatpush.xpose.msra.mxu0 0.0
    %273 = vmatpush.xpose.msra.mxu0 0.0
    %274 = vmatpush.xpose.msra.mxu0 0.0
    %275 = vmatpush.xpose.msra.mxu0 0.0
    %276 = vmatpush.xpose.msra.mxu0 0.0
    %277 = vmatpush.xpose.msra.mxu0 %v260
    %278 = vmatmul.f32.gmra.mxu0 %v257
    %v279 = vpop.f32.mrf.mxu0
    %v280 = vadd.f32 0.0, %v279
    %281 = vdwg.mxu0
    %v282 = vsel %vm229, %v254, -inf
    %283 = vmax.xlane.f32.xlu0 %v282
    %v284 = vpop.xlane.xlu0 %283
    %v285 = vsel %vm229, %v280, -inf
    %286 = vmax.xlane.f32.xlu0 %v285
    %v287 = vpop.xlane.xlu0 %286
    %v288 = vsub.f32 %v254, %v284
    %v289 = vsub.f32 %v280, %v287
    %v290 = vmul.f32 %v288, 1.442695
    %v291 = vpow.pop %v290
    %v292 = vmul.f32 %v289, 1.442695
    %v293 = vpow.pop %v292
    %v294 = vsel %vm229, %v291, 0.0
    %295 = vadd.xlane.f32.xlu0 %v294
    %v296 = vpop.xlane.xlu0 %295
    %v297 = vsel %vm229, %v293, 0.0
    %298 = vadd.xlane.f32.xlu0 %v297
    %v299 = vpop.xlane.xlu0 %298
    %v300 = vrcp.pop %v296
    %v301 = vmul.f32 %v296, %v300
    %v302 = vsub.f32 1.0, %v301
    %v303 = vmul.f32 %v300, %v302
    %v304 = vadd.f32 %v300, %v303
    %vm305 = vweird.f32 %v296
    %vm306 = vweird.f32 %v300
    %vm307 = vmor %vm305, %vm306
    %v308 = vsel %vm307, %v300, %v304
    %v309 = vand.u32 2147483647, %v296
    %vm310 = vcmp.eq.f32.partialorder %v309, 8.507059e+37
    %v311 = vand.u32 %v296, 2147483648
    %v312 = vor.u32 1.1754944e-38, %v311
    %v313 = vsel %vm310, %v312, %v308
    %v314 = vrcp.pop %v299
    %v315 = vmul.f32 %v299, %v314
    %v316 = vsub.f32 1.0, %v315
    %v317 = vmul.f32 %v314, %v316
    %v318 = vadd.f32 %v314, %v317
    %vm319 = vweird.f32 %v299
    %vm320 = vweird.f32 %v314
    %vm321 = vmor %vm319, %vm320
    %v322 = vsel %vm321, %v314, %v318
    %v323 = vand.u32 2147483647, %v299
    %vm324 = vcmp.eq.f32.partialorder %v323, 8.507059e+37
    %v325 = vand.u32 %v299, 2147483648
    %v326 = vor.u32 1.1754944e-38, %v325
    %v327 = vsel %vm324, %v326, %v322
    %v328 = vmul.f32 %v291, %v313
    %v329 = vmul.f32 %v293, %v327
    %v331 = vsel %vm229, %v328, 0
    %333 = vmatpush.msra.mxu0 0.0
    %334 = vmatpush.msra.mxu0 0.0
    %335 = vmatpush.msra.mxu0 0.0
    %336 = vmatpush.msra.mxu0 0.0
    %337 = vmatpush.msra.mxu0 0.0
    %338 = vmatpush.msra.mxu0 0.0
    %339 = vmatpush.msra.mxu0 0.0
    %340 = vmatpush.msra.mxu0 0.0
    %341 = vmatpush.msra.mxu0 0.0
    %342 = vmatpush.msra.mxu0 0.0
    %343 = vmatpush.msra.mxu0 0.0
    %344 = vmatpush.msra.mxu0 0.0
    %345 = vmatpush.msra.mxu0 0.0
    %346 = vmatpush.msra.mxu0 0.0
    %347 = vmatpush.msra.mxu0 0.0
    %348 = vmatpush.msra.mxu0 %v224
    %349 = vmatmul.f32.gmra.mxu0 %v331
    %v350 = vpop.f32.mrf.mxu0
    %v351 = vadd.f32 0.0, %v350
    %352 = vdwg.mxu0
    %v354 = vsel %vm229, %v329, 0
    %356 = vmatpush.msra.mxu0 0.0
    %357 = vmatpush.msra.mxu0 0.0
    %358 = vmatpush.msra.mxu0 0.0
    %359 = vmatpush.msra.mxu0 0.0
    %360 = vmatpush.msra.mxu0 0.0
    %361 = vmatpush.msra.mxu0 0.0
    %362 = vmatpush.msra.mxu0 0.0
    %363 = vmatpush.msra.mxu0 0.0
    %364 = vmatpush.msra.mxu0 0.0
    %365 = vmatpush.msra.mxu0 0.0
    %366 = vmatpush.msra.mxu0 0.0
    %367 = vmatpush.msra.mxu0 0.0
    %368 = vmatpush.msra.mxu0 0.0
    %369 = vmatpush.msra.mxu0 0.0
    %370 = vmatpush.msra.mxu0 0.0
    %371 = vmatpush.msra.mxu0 %v227
    %372 = vmatmul.f32.gmra.mxu0 %v354
    %v373 = vpop.f32.mrf.mxu0
    %v374 = vadd.f32 0.0, %v373
    %375 = vdwg.mxu0
    %376 = vst.msk [vmem:[#allocation2] sm:$0xff] %vm229, %v351
    %377 = vst.msk [vmem:[#allocation2 + $0x8] sm:$0xff] %vm229, %v374
    %378 = vrot.lane.b32.xlu0 %v145, 120
    %v379 = vpop.permute.xlu0 %378
    %380 = vrot.lane.b32.xlu0 %v183, 120
    %v381 = vpop.permute.xlu0 %380
    %v382 = vsel %vm229, %v379, 0
    %v384 = vsel %vm229, %v381, 0
    %386 = vmatpush.xpose.msra.mxu0 0.0
    %387 = vmatpush.xpose.msra.mxu0 0.0
    %388 = vmatpush.xpose.msra.mxu0 0.0
    %389 = vmatpush.xpose.msra.mxu0 0.0
    %390 = vmatpush.xpose.msra.mxu0 0.0
    %391 = vmatpush.xpose.msra.mxu0 0.0
    %392 = vmatpush.xpose.msra.mxu0 0.0
    %393 = vmatpush.xpose.msra.mxu0 0.0
    %394 = vmatpush.xpose.msra.mxu0 0.0
    %395 = vmatpush.xpose.msra.mxu0 0.0
    %396 = vmatpush.xpose.msra.mxu0 0.0
    %397 = vmatpush.xpose.msra.mxu0 0.0
    %398 = vmatpush.xpose.msra.mxu0 0.0
    %399 = vmatpush.xpose.msra.mxu0 0.0
    %400 = vmatpush.xpose.msra.mxu0 0.0
    %401 = vmatpush.xpose.msra.mxu0 %v384
    %402 = vmatmul.f32.gmra.mxu0 %v382
    %v403 = vpop.f32.mrf.mxu0
    %v404 = vadd.f32 0.0, %v403
    %405 = vdwg.mxu0
    %406 = vrot.lane.b32.xlu0 %v146, 120
    %v407 = vpop.permute.xlu0 %406
    %408 = vrot.lane.b32.xlu0 %v186, 120
    %v409 = vpop.permute.xlu0 %408
    %v410 = vsel %vm229, %v407, 0
    %v412 = vsel %vm229, %v409, 0
    %414 = vmatpush.xpose.msra.mxu0 0.0
    %415 = vmatpush.xpose.msra.mxu0 0.0
    %416 = vmatpush.xpose.msra.mxu0 0.0
    %417 = vmatpush.xpose.msra.mxu0 0.0
    %418 = vmatpush.xpose.msra.mxu0 0.0
    %419 = vmatpush.xpose.msra.mxu0 0.0
    %420 = vmatpush.xpose.msra.mxu0 0.0
    %421 = vmatpush.xpose.msra.mxu0 0.0
    %422 = vmatpush.xpose.msra.mxu0 0.0
    %423 = vmatpush.xpose.msra.mxu0 0.0
    %424 = vmatpush.xpose.msra.mxu0 0.0
    %425 = vmatpush.xpose.msra.mxu0 0.0
    %426 = vmatpush.xpose.msra.mxu0 0.0
    %427 = vmatpush.xpose.msra.mxu0 0.0
    %428 = vmatpush.xpose.msra.mxu0 0.0
    %429 = vmatpush.xpose.msra.mxu0 %v412
    %430 = vmatmul.f32.gmra.mxu0 %v410
    %v431 = vpop.f32.mrf.mxu0
    %v432 = vadd.f32 0.0, %v431
    %433 = vdwg.mxu0
    %v434 = vsel %vm229, %v404, -inf
    %435 = vmax.xlane.f32.xlu0 %v434
    %v436 = vpop.xlane.xlu0 %435
    %v437 = vsel %vm229, %v432, -inf
    %438 = vmax.xlane.f32.xlu0 %v437
    %v439 = vpop.xlane.xlu0 %438
    %v440 = vsub.f32 %v404, %v436
    %v441 = vsub.f32 %v432, %v439
    %v442 = vmul.f32 %v440, 1.442695
    %v443 = vpow.pop %v442
    %v444 = vmul.f32 %v441, 1.442695
    %v445 = vpow.pop %v444
    %v446 = vsel %vm229, %v443, 0.0
    %447 = vadd.xlane.f32.xlu0 %v446
    %v448 = vpop.xlane.xlu0 %447
    %v449 = vsel %vm229, %v445, 0.0
    %450 = vadd.xlane.f32.xlu0 %v449
    %v451 = vpop.xlane.xlu0 %450
    %v452 = vrcp.pop %v448
    %v453 = vmul.f32 %v448, %v452
    %v454 = vsub.f32 1.0, %v453
    %v455 = vmul.f32 %v452, %v454
    %v456 = vadd.f32 %v452, %v455
    %vm457 = vweird.f32 %v448
    %vm458 = vweird.f32 %v452
    %vm459 = vmor %vm457, %vm458
    %v460 = vsel %vm459, %v452, %v456
    %v461 = vand.u32 2147483647, %v448
    %vm462 = vcmp.eq.f32.partialorder %v461, 8.507059e+37
    %v463 = vand.u32 %v448, 2147483648
    %v464 = vor.u32 1.1754944e-38, %v463
    %v465 = vsel %vm462, %v464, %v460
    %v466 = vrcp.pop %v451
    %v467 = vmul.f32 %v451, %v466
    %v468 = vsub.f32 1.0, %v467
    %v469 = vmul.f32 %v466, %v468
    %v470 = vadd.f32 %v466, %v469
    %vm471 = vweird.f32 %v451
    %vm472 = vweird.f32 %v466
    %vm473 = vmor %vm471, %vm472
    %v474 = vsel %vm473, %v466, %v470
    %v475 = vand.u32 2147483647, %v451
    %vm476 = vcmp.eq.f32.partialorder %v475, 8.507059e+37
    %v477 = vand.u32 %v451, 2147483648
    %v478 = vor.u32 1.1754944e-38, %v477
    %v479 = vsel %vm476, %v478, %v474
    %v480 = vmul.f32 %v443, %v465
    %v481 = vmul.f32 %v445, %v479
    %483 = vrot.lane.b32.xlu0 %v224, 120
    %v484 = vpop.permute.xlu0 %483
    %v487 = vsel %vm229, %v480, 0
    %489 = vmatpush.msra.mxu0 0.0
    %490 = vmatpush.msra.mxu0 0.0
    %491 = vmatpush.msra.mxu0 0.0
    %492 = vmatpush.msra.mxu0 0.0
    %493 = vmatpush.msra.mxu0 0.0
    %494 = vmatpush.msra.mxu0 0.0
    %495 = vmatpush.msra.mxu0 0.0
    %496 = vmatpush.msra.mxu0 0.0
    %497 = vmatpush.msra.mxu0 0.0
    %498 = vmatpush.msra.mxu0 0.0
    %499 = vmatpush.msra.mxu0 0.0
    %500 = vmatpush.msra.mxu0 0.0
    %501 = vmatpush.msra.mxu0 0.0
    %502 = vmatpush.msra.mxu0 0.0
    %503 = vmatpush.msra.mxu0 0.0
    %504 = vmatpush.msra.mxu0 %v484
    %505 = vmatmul.f32.gmra.mxu0 %v487
    %v506 = vpop.f32.mrf.mxu0
    %v507 = vadd.f32 0.0, %v506
    %508 = vdwg.mxu0
    %510 = vrot.lane.b32.xlu0 %v227, 120
    %v511 = vpop.permute.xlu0 %510
    %v514 = vsel %vm229, %v481, 0
    %516 = vmatpush.msra.mxu0 0.0
    %517 = vmatpush.msra.mxu0 0.0
    %518 = vmatpush.msra.mxu0 0.0
    %519 = vmatpush.msra.mxu0 0.0
    %520 = vmatpush.msra.mxu0 0.0
    %521 = vmatpush.msra.mxu0 0.0
    %522 = vmatpush.msra.mxu0 0.0
    %523 = vmatpush.msra.mxu0 0.0
    %524 = vmatpush.msra.mxu0 0.0
    %525 = vmatpush.msra.mxu0 0.0
    %526 = vmatpush.msra.mxu0 0.0
    %527 = vmatpush.msra.mxu0 0.0
    %528 = vmatpush.msra.mxu0 0.0
    %529 = vmatpush.msra.mxu0 0.0
    %530 = vmatpush.msra.mxu0 0.0
    %531 = vmatpush.msra.mxu0 %v511
    %532 = vmatmul.f32.gmra.mxu0 %v514
    %v533 = vpop.f32.mrf.mxu0
    %v534 = vadd.f32 0.0, %v533
    %535 = vdwg.mxu0
    %538 = vrot.lane.b32.xlu0 %v507, 8
    %v539 = vpop.permute.xlu0 %538
    %540 = vrot.lane.b32.xlu0 %v534, 8
    %v541 = vpop.permute.xlu0 %540
    %vm544 = vcmask 130112
    %545 = vst.msk [vmem:[#allocation2] sm:$0xff] %vm544, %v539
    %546 = vst.msk [vmem:[#allocation2 + $0x8] sm:$0xff] %vm544, %v541
    %547 = vrot.lane.b32.xlu0 %v145, 112
    %v548 = vpop.permute.xlu0 %547
    %549 = vrot.lane.b32.xlu0 %v183, 112
    %v550 = vpop.permute.xlu0 %549
    %v551 = vsel %vm229, %v548, 0
    %v553 = vsel %vm229, %v550, 0
    %555 = vmatpush.xpose.msra.mxu0 0.0
    %556 = vmatpush.xpose.msra.mxu0 0.0
    %557 = vmatpush.xpose.msra.mxu0 0.0
    %558 = vmatpush.xpose.msra.mxu0 0.0
    %559 = vmatpush.xpose.msra.mxu0 0.0
    %560 = vmatpush.xpose.msra.mxu0 0.0
    %561 = vmatpush.xpose.msra.mxu0 0.0
    %562 = vmatpush.xpose.msra.mxu0 0.0
    %563 = vmatpush.xpose.msra.mxu0 0.0
    %564 = vmatpush.xpose.msra.mxu0 0.0
    %565 = vmatpush.xpose.msra.mxu0 0.0
    %566 = vmatpush.xpose.msra.mxu0 0.0
    %567 = vmatpush.xpose.msra.mxu0 0.0
    %568 = vmatpush.xpose.msra.mxu0 0.0
    %569 = vmatpush.xpose.msra.mxu0 0.0
    %570 = vmatpush.xpose.msra.mxu0 %v553
    %571 = vmatmul.f32.gmra.mxu0 %v551
    %v572 = vpop.f32.mrf.mxu0
    %v573 = vadd.f32 0.0, %v572
    %574 = vdwg.mxu0
    %575 = vrot.lane.b32.xlu0 %v146, 112
    %v576 = vpop.permute.xlu0 %575
    %577 = vrot.lane.b32.xlu0 %v186, 112
    %v578 = vpop.permute.xlu0 %577
    %v579 = vsel %vm229, %v576, 0
    %v581 = vsel %vm229, %v578, 0
    %583 = vmatpush.xpose.msra.mxu0 0.0
    %584 = vmatpush.xpose.msra.mxu0 0.0
    %585 = vmatpush.xpose.msra.mxu0 0.0
    %586 = vmatpush.xpose.msra.mxu0 0.0
    %587 = vmatpush.xpose.msra.mxu0 0.0
    %588 = vmatpush.xpose.msra.mxu0 0.0
    %589 = vmatpush.xpose.msra.mxu0 0.0
    %590 = vmatpush.xpose.msra.mxu0 0.0
    %591 = vmatpush.xpose.msra.mxu0 0.0
    %592 = vmatpush.xpose.msra.mxu0 0.0
    %593 = vmatpush.xpose.msra.mxu0 0.0
    %594 = vmatpush.xpose.msra.mxu0 0.0
    %595 = vmatpush.xpose.msra.mxu0 0.0
    %596 = vmatpush.xpose.msra.mxu0 0.0
    %597 = vmatpush.xpose.msra.mxu0 0.0
    %598 = vmatpush.xpose.msra.mxu0 %v581
    %599 = vmatmul.f32.gmra.mxu0 %v579
    %v600 = vpop.f32.mrf.mxu0
    %v601 = vadd.f32 0.0, %v600
    %602 = vdwg.mxu0
    %v603 = vsel %vm229, %v573, -inf
    %604 = vmax.xlane.f32.xlu0 %v603
    %v605 = vpop.xlane.xlu0 %604
    %v606 = vsel %vm229, %v601, -inf
    %607 = vmax.xlane.f32.xlu0 %v606
    %v608 = vpop.xlane.xlu0 %607
    %v609 = vsub.f32 %v573, %v605
    %v610 = vsub.f32 %v601, %v608
    %v611 = vmul.f32 %v609, 1.442695
    %v612 = vpow.pop %v611
    %v613 = vmul.f32 %v610, 1.442695
    %v614 = vpow.pop %v613
    %v615 = vsel %vm229, %v612, 0.0
    %616 = vadd.xlane.f32.xlu0 %v615
    %v617 = vpop.xlane.xlu0 %616
    %v618 = vsel %vm229, %v614, 0.0
    %619 = vadd.xlane.f32.xlu0 %v618
    %v620 = vpop.xlane.xlu0 %619
    %v621 = vrcp.pop %v617
    %v622 = vmul.f32 %v617, %v621
    %v623 = vsub.f32 1.0, %v622
    %v624 = vmul.f32 %v621, %v623
    %v625 = vadd.f32 %v621, %v624
    %vm626 = vweird.f32 %v617
    %vm627 = vweird.f32 %v621
    %vm628 = vmor %vm626, %vm627
    %v629 = vsel %vm628, %v621, %v625
    %v630 = vand.u32 2147483647, %v617
    %vm631 = vcmp.eq.f32.partialorder %v630, 8.507059e+37
    %v632 = vand.u32 %v617, 2147483648
    %v633 = vor.u32 1.1754944e-38, %v632
    %v634 = vsel %vm631, %v633, %v629
    %v635 = vrcp.pop %v620
    %v636 = vmul.f32 %v620, %v635
    %v637 = vsub.f32 1.0, %v636
    %v638 = vmul.f32 %v635, %v637
    %v639 = vadd.f32 %v635, %v638
    %vm640 = vweird.f32 %v620
    %vm641 = vweird.f32 %v635
    %vm642 = vmor %vm640, %vm641
    %v643 = vsel %vm642, %v635, %v639
    %v644 = vand.u32 2147483647, %v620
    %vm645 = vcmp.eq.f32.partialorder %v644, 8.507059e+37
    %v646 = vand.u32 %v620, 2147483648
    %v647 = vor.u32 1.1754944e-38, %v646
    %v648 = vsel %vm645, %v647, %v643
    %v649 = vmul.f32 %v612, %v634
    %v650 = vmul.f32 %v614, %v648
    %651 = vrot.lane.b32.xlu0 %v224, 112
    %v652 = vpop.permute.xlu0 %651
    %v655 = vsel %vm229, %v649, 0
    %657 = vmatpush.msra.mxu0 0.0
    %658 = vmatpush.msra.mxu0 0.0
    %659 = vmatpush.msra.mxu0 0.0
    %660 = vmatpush.msra.mxu0 0.0
    %661 = vmatpush.msra.mxu0 0.0
    %662 = vmatpush.msra.mxu0 0.0
    %663 = vmatpush.msra.mxu0 0.0
    %664 = vmatpush.msra.mxu0 0.0
    %665 = vmatpush.msra.mxu0 0.0
    %666 = vmatpush.msra.mxu0 0.0
    %667 = vmatpush.msra.mxu0 0.0
    %668 = vmatpush.msra.mxu0 0.0
    %669 = vmatpush.msra.mxu0 0.0
    %670 = vmatpush.msra.mxu0 0.0
    %671 = vmatpush.msra.mxu0 0.0
    %672 = vmatpush.msra.mxu0 %v652
    %673 = vmatmul.f32.gmra.mxu0 %v655
    %v674 = vpop.f32.mrf.mxu0
    %v675 = vadd.f32 0.0, %v674
    %676 = vdwg.mxu0
    %677 = vrot.lane.b32.xlu0 %v227, 112
    %v678 = vpop.permute.xlu0 %677
    %v681 = vsel %vm229, %v650, 0
    %683 = vmatpush.msra.mxu0 0.0
    %684 = vmatpush.msra.mxu0 0.0
    %685 = vmatpush.msra.mxu0 0.0
    %686 = vmatpush.msra.mxu0 0.0
    %687 = vmatpush.msra.mxu0 0.0
    %688 = vmatpush.msra.mxu0 0.0
    %689 = vmatpush.msra.mxu0 0.0
    %690 = vmatpush.msra.mxu0 0.0
    %691 = vmatpush.msra.mxu0 0.0
    %692 = vmatpush.msra.mxu0 0.0
    %693 = vmatpush.msra.mxu0 0.0
    %694 = vmatpush.msra.mxu0 0.0
    %695 = vmatpush.msra.mxu0 0.0
    %696 = vmatpush.msra.mxu0 0.0
    %697 = vmatpush.msra.mxu0 0.0
    %698 = vmatpush.msra.mxu0 %v678
    %699 = vmatmul.f32.gmra.mxu0 %v681
    %v700 = vpop.f32.mrf.mxu0
    %v701 = vadd.f32 0.0, %v700
    %702 = vdwg.mxu0
    %705 = vrot.lane.b32.xlu0 %v675, 16
    %v706 = vpop.permute.xlu0 %705
    %707 = vrot.lane.b32.xlu0 %v701, 16
    %v708 = vpop.permute.xlu0 %707
    %vm711 = vcmask 195712
    %712 = vst.msk [vmem:[#allocation2] sm:$0xff] %vm711, %v706
    %713 = vst.msk [vmem:[#allocation2 + $0x8] sm:$0xff] %vm711, %v708
    %714 = vrot.lane.b32.xlu0 %v145, 104
    %v715 = vpop.permute.xlu0 %714
    %716 = vrot.lane.b32.xlu0 %v183, 104
    %v717 = vpop.permute.xlu0 %716
    %v718 = vsel %vm229, %v715, 0
    %v720 = vsel %vm229, %v717, 0
    %722 = vmatpush.xpose.msra.mxu0 0.0
    %723 = vmatpush.xpose.msra.mxu0 0.0
    %724 = vmatpush.xpose.msra.mxu0 0.0
    %725 = vmatpush.xpose.msra.mxu0 0.0
    %726 = vmatpush.xpose.msra.mxu0 0.0
    %727 = vmatpush.xpose.msra.mxu0 0.0
    %728 = vmatpush.xpose.msra.mxu0 0.0
    %729 = vmatpush.xpose.msra.mxu0 0.0
    %730 = vmatpush.xpose.msra.mxu0 0.0
    %731 = vmatpush.xpose.msra.mxu0 0.0
    %732 = vmatpush.xpose.msra.mxu0 0.0
    %733 = vmatpush.xpose.msra.mxu0 0.0
    %734 = vmatpush.xpose.msra.mxu0 0.0
    %735 = vmatpush.xpose.msra.mxu0 0.0
    %736 = vmatpush.xpose.msra.mxu0 0.0
    %737 = vmatpush.xpose.msra.mxu0 %v720
    %738 = vmatmul.f32.gmra.mxu0 %v718
    %v739 = vpop.f32.mrf.mxu0
    %v740 = vadd.f32 0.0, %v739
    %741 = vdwg.mxu0
    %742 = vrot.lane.b32.xlu0 %v146, 104
    %v743 = vpop.permute.xlu0 %742
    %744 = vrot.lane.b32.xlu0 %v186, 104
    %v745 = vpop.permute.xlu0 %744
    %v746 = vsel %vm229, %v743, 0
    %v748 = vsel %vm229, %v745, 0
    %750 = vmatpush.xpose.msra.mxu0 0.0
    %751 = vmatpush.xpose.msra.mxu0 0.0
    %752 = vmatpush.xpose.msra.mxu0 0.0
    %753 = vmatpush.xpose.msra.mxu0 0.0
    %754 = vmatpush.xpose.msra.mxu0 0.0
    %755 = vmatpush.xpose.msra.mxu0 0.0
    %756 = vmatpush.xpose.msra.mxu0 0.0
    %757 = vmatpush.xpose.msra.mxu0 0.0
    %758 = vmatpush.xpose.msra.mxu0 0.0
    %759 = vmatpush.xpose.msra.mxu0 0.0
    %760 = vmatpush.xpose.msra.mxu0 0.0
    %761 = vmatpush.xpose.msra.mxu0 0.0
    %762 = vmatpush.xpose.msra.mxu0 0.0
    %763 = vmatpush.xpose.msra.mxu0 0.0
    %764 = vmatpush.xpose.msra.mxu0 0.0
    %765 = vmatpush.xpose.msra.mxu0 %v748
    %766 = vmatmul.f32.gmra.mxu0 %v746
    %v767 = vpop.f32.mrf.mxu0
    %v768 = vadd.f32 0.0, %v767
    %769 = vdwg.mxu0
    %v770 = vsel %vm229, %v740, -inf
    %771 = vmax.xlane.f32.xlu0 %v770
    %v772 = vpop.xlane.xlu0 %771
    %v773 = vsel %vm229, %v768, -inf
    %774 = vmax.xlane.f32.xlu0 %v773
    %v775 = vpop.xlane.xlu0 %774
    %v776 = vsub.f32 %v740, %v772
    %v777 = vsub.f32 %v768, %v775
    %v778 = vmul.f32 %v776, 1.442695
    %v779 = vpow.pop %v778
    %v780 = vmul.f32 %v777, 1.442695
    %v781 = vpow.pop %v780
    %v782 = vsel %vm229, %v779, 0.0
    %783 = vadd.xlane.f32.xlu0 %v782
    %v784 = vpop.xlane.xlu0 %783
    %v785 = vsel %vm229, %v781, 0.0
    %786 = vadd.xlane.f32.xlu0 %v785
    %v787 = vpop.xlane.xlu0 %786
    %v788 = vrcp.pop %v784
    %v789 = vmul.f32 %v784, %v788
    %v790 = vsub.f32 1.0, %v789
    %v791 = vmul.f32 %v788, %v790
    %v792 = vadd.f32 %v788, %v791
    %vm793 = vweird.f32 %v784
    %vm794 = vweird.f32 %v788
    %vm795 = vmor %vm793, %vm794
    %v796 = vsel %vm795, %v788, %v792
    %v797 = vand.u32 2147483647, %v784
    %vm798 = vcmp.eq.f32.partialorder %v797, 8.507059e+37
    %v799 = vand.u32 %v784, 2147483648
    %v800 = vor.u32 1.1754944e-38, %v799
    %v801 = vsel %vm798, %v800, %v796
    %v802 = vrcp.pop %v787
    %v803 = vmul.f32 %v787, %v802
    %v804 = vsub.f32 1.0, %v803
    %v805 = vmul.f32 %v802, %v804
    %v806 = vadd.f32 %v802, %v805
    %vm807 = vweird.f32 %v787
    %vm808 = vweird.f32 %v802
    %vm809 = vmor %vm807, %vm808
    %v810 = vsel %vm809, %v802, %v806
    %v811 = vand.u32 2147483647, %v787
    %vm812 = vcmp.eq.f32.partialorder %v811, 8.507059e+37
    %v813 = vand.u32 %v787, 2147483648
    %v814 = vor.u32 1.1754944e-38, %v813
    %v815 = vsel %vm812, %v814, %v810
    %v816 = vmul.f32 %v779, %v801
    %v817 = vmul.f32 %v781, %v815
    %818 = vrot.lane.b32.xlu0 %v224, 104
    %v819 = vpop.permute.xlu0 %818
    %v822 = vsel %vm229, %v816, 0
    %824 = vmatpush.msra.mxu0 0.0
    %825 = vmatpush.msra.mxu0 0.0
    %826 = vmatpush.msra.mxu0 0.0
    %827 = vmatpush.msra.mxu0 0.0
    %828 = vmatpush.msra.mxu0 0.0
    %829 = vmatpush.msra.mxu0 0.0
    %830 = vmatpush.msra.mxu0 0.0
    %831 = vmatpush.msra.mxu0 0.0
    %832 = vmatpush.msra.mxu0 0.0
    %833 = vmatpush.msra.mxu0 0.0
    %834 = vmatpush.msra.mxu0 0.0
    %835 = vmatpush.msra.mxu0 0.0
    %836 = vmatpush.msra.mxu0 0.0
    %837 = vmatpush.msra.mxu0 0.0
    %838 = vmatpush.msra.mxu0 0.0
    %839 = vmatpush.msra.mxu0 %v819
    %840 = vmatmul.f32.gmra.mxu0 %v822
    %v841 = vpop.f32.mrf.mxu0
    %v842 = vadd.f32 0.0, %v841
    %843 = vdwg.mxu0
    %844 = vrot.lane.b32.xlu0 %v227, 104
    %v845 = vpop.permute.xlu0 %844
    %v848 = vsel %vm229, %v817, 0
    %850 = vmatpush.msra.mxu0 0.0
    %851 = vmatpush.msra.mxu0 0.0
    %852 = vmatpush.msra.mxu0 0.0
    %853 = vmatpush.msra.mxu0 0.0
    %854 = vmatpush.msra.mxu0 0.0
    %855 = vmatpush.msra.mxu0 0.0
    %856 = vmatpush.msra.mxu0 0.0
    %857 = vmatpush.msra.mxu0 0.0
    %858 = vmatpush.msra.mxu0 0.0
    %859 = vmatpush.msra.mxu0 0.0
    %860 = vmatpush.msra.mxu0 0.0
    %861 = vmatpush.msra.mxu0 0.0
    %862 = vmatpush.msra.mxu0 0.0
    %863 = vmatpush.msra.mxu0 0.0
    %864 = vmatpush.msra.mxu0 0.0
    %865 = vmatpush.msra.mxu0 %v845
    %866 = vmatmul.f32.gmra.mxu0 %v848
    %v867 = vpop.f32.mrf.mxu0
    %v868 = vadd.f32 0.0, %v867
    %869 = vdwg.mxu0
    %872 = vrot.lane.b32.xlu0 %v842, 24
    %v873 = vpop.permute.xlu0 %872
    %874 = vrot.lane.b32.xlu0 %v868, 24
    %v875 = vpop.permute.xlu0 %874
    %vm878 = vcmask 261312
    %879 = vst.msk [vmem:[#allocation2] sm:$0xff] %vm878, %v873
    %880 = vst.msk [vmem:[#allocation2 + $0x8] sm:$0xff] %vm878, %v875
    %v881 = vld [vmem:[#allocation2] sm:$0xff]
    %v882 = vld [vmem:[#allocation2 + $0x8] sm:$0xff]
    %v883 = vld [vmem:[#allocation11] sm:$0xff]
    %v884 = vld [vmem:[#allocation11 + $0x8] sm:$0xff]
    %v885 = vld [vmem:[#allocation11 + $0x10] sm:$0xff]
    %v886 = vld [vmem:[#allocation11 + $0x18] sm:$0xff]
    %v887 = vld [vmem:[%s6] sm:$0x1]
    %v889 = vperm.slane %v887, 0
    %v892 = vsel %vm115, %v881, 0
    %v895 = vsel %vm115, %v882, 0
    %897 = vmatpush.msra.mxu0 0.0
    %898 = vmatpush.msra.mxu0 0.0
    %899 = vmatpush.msra.mxu0 0.0
    %900 = vmatpush.msra.mxu0 0.0
    %901 = vmatpush.msra.mxu0 0.0
    %902 = vmatpush.msra.mxu0 0.0
    %903 = vmatpush.msra.mxu0 0.0
    %904 = vmatpush.msra.mxu0 0.0
    %905 = vmatpush.msra.mxu0 0.0
    %906 = vmatpush.msra.mxu0 0.0
    %907 = vmatpush.msra.mxu0 0.0
    %908 = vmatpush.msra.mxu0 0.0
    %909 = vmatpush.msra.mxu0 %v886
    %910 = vmatpush.msra.mxu0 %v885
    %911 = vmatpush.msra.mxu0 %v884
    %912 = vmatpush.msra.mxu0 %v883
    %913 = vmatmul.f32.gmra.mxu0 %v892
    %v914 = vpop.f32.mrf.mxu0
    %v915 = vadd.f32 %v889, %v914
    %916 = vmatmul.f32.gmra.mxu0 %v895
    %v917 = vpop.f32.mrf.mxu0
    %v918 = vadd.f32 %v889, %v917
    %919 = vdwg.mxu0
    %920 = vst.msk [vmem:[#allocation12] sm:$0xff] %vm115, %v915
    %921 = vst.msk [vmem:[#allocation12 + $0x8] sm:$0xff] %vm115, %v918
    // Predicated region
    $region50: #{tpu_custom_call.1} parent=1 // pred_check
      _
    $region51: #{tpu_custom_call.1} parent=1 // pred_check_branch
      %923 = sbr.rel (0) target = $region53
    $region52: #{tpu_custom_call.1} parent=1 // pred_region
      %925 = vsyncadd [#allocation5], 0
      %s926 = sshll.u32 [#allocation12], 4
      %s927 = int_to_ptr.vmem [resolvable:$true] %s926
      %s928 = sshll.u32 %s7, 4
      %s929 = int_to_ptr.hbm [resolvable:$true] %s928
      %934 = dma.vmem_to_hbm [thread:$0]  %s927, 256, %s929, [#allocation5], 128, 128, 8
    $region53: #{tpu_custom_call.1} parent=1 // pred_fallthru
      _
    // Predicated region
    $region54: #{tpu_custom_call.1} parent=1 // pred_check
      _
    $region55: #{tpu_custom_call.1} parent=1 // pred_check_branch
      %936 = sbr.rel (0) target = $region57
    $region56: #{tpu_custom_call.1} parent=1 // pred_region
      %938 = dma.done [#allocation5], 256
    $region57: #{tpu_custom_call.1} parent=1 // pred_fallthru
      _
    %939 = vsyncpa [#allocation4], 1
    %940 = vsyncpa [#allocation7], 1
    %941 = vsyncpa [#allocation10], 1
    %942 = vsyncpa [#allocation5], 1

</llo_original>
